<compile_context>
chip_gen: v7x
topology: tpu7x:2x2x1
jax: 0.10.0
libtpu: 0.0.40
codegen_flags: <defaults>
</compile_context>

<pallas_src>
import functools

import jax
import jax.numpy as jnp
from jax.experimental import pallas as pl
from jax.experimental.pallas import tpu as pltpu

_SUBLANE = 8      # f32 sublane tile
_OUT_LANES = 128  # lane-dense output slab width


# -----------------------------------------------------------------------------
# Fused kernel: wavefronted multi-layer LSTM + both heads, single invocation.
# -----------------------------------------------------------------------------
def _fused_kernel(gates0_ref, whh0_ref, *rest, hidden_size, num_layers,
                  seq_len, batch_padded, num_experts):
    H, S, L, Bp = hidden_size, seq_len, num_layers, batch_padded
    f32, bf16 = jnp.float32, jnp.bfloat16

    if L > 1:
        (wcomb_ref, brest_ref, w1c_ref, b1c_ref, w2_ref, b2_ref,
         wlast_ref, blast_ref, out_ref) = rest
    else:
        wcomb_ref = brest_ref = None
        (w1c_ref, b1c_ref, w2_ref, b2_ref,
         wlast_ref, blast_ref, out_ref) = rest

    def cell(g, c_prev):
        # Gate layout [i | f | o | g]: one sigmoid over 3H lanes + one tanh.
        sig = jax.nn.sigmoid(g[:, :3 * H])
        g_g = jnp.tanh(g[:, 3 * H:])
        i_g, f_g, o_g = sig[:, :H], sig[:, H:2 * H], sig[:, 2 * H:]
        c_new = f_g * c_prev + i_g * g_g
        h_new = o_g * jnp.tanh(c_new)
        return h_new, c_new

    h = [jnp.zeros((Bp, H), f32) for _ in range(L)]
    c = [jnp.zeros((Bp, H), f32) for _ in range(L)]

    # Wavefront over layers: at stage s layer l runs step t = s - l.  All
    # active layers' matmuls within a stage are mutually independent.
    for stage in range(S + L - 1):
        new_h, new_c = list(h), list(c)
        for l in range(L):
            t = stage - l
            if not 0 <= t < S:
                continue
            if l == 0:
                # Input projection + bias were hoisted into gates0 (wrapper).
                g = gates0_ref[t] + jnp.dot(
                    h[0].astype(bf16), whh0_ref[...],
                    preferred_element_type=f32)
            else:
                # Fused input+hidden projection: (Bp,2H)@(2H,4H).
                x_in = jnp.concatenate([h[l - 1], h[l]], axis=1).astype(bf16)
                g = (jnp.dot(x_in, wcomb_ref[l - 1],
                             preferred_element_type=f32) + brest_ref[l - 1])
            new_h[l], new_c[l] = cell(g, c[l])
        h, c = new_h, new_c

    # ---- Heads on the final hidden state (first Linear of both heads fused).
    hf = h[L - 1].astype(bf16)
    z = jnp.maximum(jnp.dot(hf, w1c_ref[...], preferred_element_type=f32)
                    + b1c_ref[...], 0.0)
    z1, zc = z[:, :2 * H], z[:, 2 * H:]
    z2 = jnp.maximum(jnp.dot(z1.astype(bf16), w2_ref[...],
                             preferred_element_type=f32) + b2_ref[...], 0.0)
    # Last Linear of both heads fused into one lane-dense (2H, 128) matmul.
    zfinal = jnp.concatenate([z2, zc], axis=1).astype(bf16)
    pre = (jnp.dot(zfinal, wlast_ref[...], preferred_element_type=f32)
           + blast_ref[...])
    lane = jax.lax.broadcasted_iota(jnp.int32, pre.shape, 1)
    out_ref[...] = jnp.where(lane == num_experts, jax.nn.sigmoid(pre), pre)


# -----------------------------------------------------------------------------
# Jitted forward: tiny XLA glue (gathers, gate-table precompute) + fused kernel.
# -----------------------------------------------------------------------------
def _reorder_gates(w, H):
    # PyTorch LSTM gate order [i|f|g|o] -> [i|f|o|g] (sigmoid gates contiguous).
    return jnp.concatenate(
        [w[..., :2 * H], w[..., 3 * H:], w[..., 2 * H:3 * H]], axis=-1)


@functools.partial(jax.jit, static_argnames=("hidden_size", "num_layers"))
def forward(params, context_experts, context_layers, *, hidden_size,
            num_layers):
    H, L = hidden_size, num_layers
    E = params["w3"].shape[1]
    B, S, _ = context_experts.shape
    Bp = ((B + _SUBLANE - 1) // _SUBLANE) * _SUBLANE
    f32, bf16 = jnp.float32, jnp.bfloat16

    # Layer-0 input projection hoisted into the (tiny) embedding tables.
    wih0 = _reorder_gates(params["wih0"], H)                  # (2H, 4H)
    bias0 = _reorder_gates(params["bias"][0], H)              # (1, 4H)
    expert_tab = params["expert_emb"] @ wih0[:H, :]           # (E, 4H)
    layer_tab = params["layer_emb"] @ wih0[H:, :]             # (32, 4H)
    gates0 = (expert_tab[context_experts].mean(axis=2)
              + layer_tab[context_layers] + bias0)            # (B, S, 4H)
    gates0 = jnp.transpose(gates0, (1, 0, 2)).astype(f32)     # (S, B, 4H)
    gates0 = jnp.pad(gates0, ((0, 0), (0, Bp - B), (0, 0)))   # (S, Bp, 4H)

    whh = _reorder_gates(params["whh"], H)                    # (L, H, 4H)
    args = [gates0, whh[0].astype(bf16)]
    if L > 1:
        wcomb = jnp.concatenate(
            [_reorder_gates(params["wih_rest"], H), whh[1:]],
            axis=1).astype(bf16)                              # (L-1, 2H, 4H)
        brest = _reorder_gates(params["bias"], H)[1:]         # (L-1, 1, 4H)
        args += [wcomb, brest]

    # Heads: first Linears fused (H,3H); last Linears fused block-diagonally
    # into one lane-dense (2H, 128) weight (logits cols [0,E), conf col E).
    w1c = jnp.concatenate([params["w1"], params["wc1"]], axis=1).astype(bf16)
    b1c = jnp.concatenate([params["b1"], params["bc1"]], axis=1)
    wlast = jnp.zeros((2 * H, _OUT_LANES), f32)
    wlast = wlast.at[:H, :E].set(params["w3"]).at[H:, E].set(params["wc2"][:, 0])
    blast = jnp.zeros((1, _OUT_LANES), f32)
    blast = blast.at[0, :E].set(params["b3"][0]).at[0, E].set(params["bc2"][0, 0])
    args += [w1c, b1c, params["w2"].astype(bf16), params["b2"],
             wlast.astype(bf16), blast]

    kernel = functools.partial(
        _fused_kernel, hidden_size=H, num_layers=L, seq_len=S,
        batch_padded=Bp, num_experts=E)
    slab = pl.pallas_call(
        kernel,
        out_shape=jax.ShapeDtypeStruct((Bp, _OUT_LANES), f32),
        in_specs=[pl.BlockSpec(memory_space=pltpu.MemorySpace.VMEM)
                  for _ in args],
        out_specs=pl.BlockSpec(memory_space=pltpu.MemorySpace.VMEM),
    )(*args)
    return slab[:B, :E], slab[:B, E:E + 1]


# -----------------------------------------------------------------------------
# Deterministic parameter init (LSTM weights pre-transposed; b_ih+b_hh fused).
# NOTE: when porting real PyTorch weights, bias = b_ih + b_hh must be summed.
# -----------------------------------------------------------------------------
def init_params(key, *, num_experts, hidden_size, num_layers,
                num_layer_positions=32):
    E, H, L = num_experts, hidden_size, num_layers
    ks = jax.random.split(key, 16)
    u = lambda k, s: jax.random.uniform(k, s, jnp.float32, -0.1, 0.1)
    params = {
        "expert_emb": u(ks[0], (E, H)),
        "layer_emb": u(ks[1], (num_layer_positions, H)),
        "wih0": u(ks[2], (2 * H, 4 * H)),
        "whh": u(ks[4], (L, H, 4 * H)),
        "bias": u(ks[5], (L, 1, 4 * H)),
        "w1": u(ks[6], (H, 2 * H)), "b1": u(ks[7], (1, 2 * H)),
        "w2": u(ks[8], (2 * H, H)), "b2": u(ks[9], (1, H)),
        "w3": u(ks[10], (H, E)), "b3": u(ks[11], (1, E)),
        "wc1": u(ks[12], (H, H)), "bc1": u(ks[13], (1, H)),
        "wc2": u(ks[14], (H, 1)), "bc2": u(ks[15], (1, 1)),
    }
    if L > 1:
        params["wih_rest"] = u(ks[3], (L - 1, H, 4 * H))
    return params


# -----------------------------------------------------------------------------
# Pure-JAX f32 reference (eval-mode semantics, PyTorch gate order).
# -----------------------------------------------------------------------------
def reference_forward(p, context_experts, context_layers, *, hidden_size,
                      num_layers):
    H, L = hidden_size, num_layers
    x = jnp.concatenate([p["expert_emb"][context_experts].mean(axis=2),
                         p["layer_emb"][context_layers]], axis=-1)
    B, S, _ = x.shape
    seq = x
    for l in range(L):
        wih = p["wih0"] if l == 0 else p["wih_rest"][l - 1]
        whh, b = p["whh"][l], p["bias"][l]
        h = jnp.zeros((B, H), jnp.float32)
        c = jnp.zeros((B, H), jnp.float32)
        outs = []
        for t in range(S):
            gates = seq[:, t, :] @ wih + h @ whh + b
            i = jax.nn.sigmoid(gates[:, :H])
            f = jax.nn.sigmoid(gates[:, H:2 * H])
            g = jnp.tanh(gates[:, 2 * H:3 * H])
            o = jax.nn.sigmoid(gates[:, 3 * H:])
            c = f * c + i * g
            h = o * jnp.tanh(c)
            outs.append(h)
        seq = jnp.stack(outs, axis=1)
    hf = seq[:, -1, :]
    z = jax.nn.relu(hf @ p["w1"] + p["b1"])
    z = jax.nn.relu(z @ p["w2"] + p["b2"])
    logits = z @ p["w3"] + p["b3"]
    zc = jax.nn.relu(hf @ p["wc1"] + p["bc1"])
    conf = jax.nn.sigmoid(zc @ p["wc2"] + p["bc2"])
    return logits, conf


if __name__ == "__main__":
    B, S, K = 2, 8, 2          # batch, seq_len, top_k
    E, H, L = 8, 32, 2         # num_experts, hidden_size, num_layers

    key = jax.random.PRNGKey(0)
    k_params, k_e, k_l = jax.random.split(key, 3)
    params = init_params(k_params, num_experts=E, hidden_size=H, num_layers=L)

    context_experts = jax.random.randint(k_e, (B, S, K), 0, E, dtype=jnp.int32)
    context_layers = jax.random.randint(k_l, (B, S), 0, 32, dtype=jnp.int32)

    logits, conf = forward(params, context_experts, context_layers,
                           hidden_size=H, num_layers=L)
    jax.block_until_ready((logits, conf))

    ref_logits, ref_conf = reference_forward(params, context_experts,
                                             context_layers, hidden_size=H,
                                             num_layers=L)

    assert logits.shape == (B, E) and conf.shape == (B, 1)
    # Tolerance accounts for bf16 matmul operands (f32 accumulation/state).
    if not (jnp.allclose(logits, ref_logits, atol=1e-2, rtol=1e-2)
            and jnp.allclose(conf, ref_conf, atol=1e-2, rtol=1e-2)):
        raise SystemExit("MISMATCH vs pure-JAX reference")

    print("KERNEL_OK")
</pallas_src>

<mosaic_0001>
module attributes {stable_mosaic.version = 11 : i64} {
  func.func @_fused_kernel(%arg0: memref<8x8x128xf32, #tpu.memory_space<vmem>>, %arg1: memref<32x128xbf16, #tpu.memory_space<vmem>>, %arg2: memref<1x64x128xbf16, #tpu.memory_space<vmem>>, %arg3: memref<1x1x128xf32, #tpu.memory_space<vmem>>, %arg4: memref<32x96xbf16, #tpu.memory_space<vmem>>, %arg5: memref<1x96xf32, #tpu.memory_space<vmem>>, %arg6: memref<64x32xbf16, #tpu.memory_space<vmem>>, %arg7: memref<1x32xf32, #tpu.memory_space<vmem>>, %arg8: memref<64x128xbf16, #tpu.memory_space<vmem>>, %arg9: memref<1x128xf32, #tpu.memory_space<vmem>>, %arg10: memref<8x128xf32, #tpu.memory_space<vmem>>) attributes {dimension_semantics = [], scalar_prefetch = 0 : i64, scratch_operands = 0 : i64, tpu.core_type = #tpu.core_type<tc>} {
    %cst = arith.constant 0.000000e+00 : f32
    %0 = vector.broadcast %cst : f32 to vector<8x32xf32>
    %cst_0 = arith.constant 0.000000e+00 : f32
    %1 = vector.broadcast %cst_0 : f32 to vector<8x32xf32>
    %cst_1 = arith.constant 0.000000e+00 : f32
    %2 = vector.broadcast %cst_1 : f32 to vector<8x32xf32>
    %cst_2 = arith.constant 0.000000e+00 : f32
    %3 = vector.broadcast %cst_2 : f32 to vector<8x32xf32>
    %c0 = arith.constant 0 : index
    %c0_3 = arith.constant 0 : index
    %c0_4 = arith.constant 0 : index
    %4 = vector.load %arg0[%c0, %c0_3, %c0_4] : memref<8x8x128xf32, #tpu.memory_space<vmem>>, vector<1x8x128xf32>
    %5 = vector.shape_cast %4 : vector<1x8x128xf32> to vector<8x128xf32>
    %6 = arith.truncf %0 : vector<8x32xf32> to vector<8x32xbf16>
    %c0_5 = arith.constant 0 : index
    %c0_6 = arith.constant 0 : index
    %7 = vector.load %arg1[%c0_5, %c0_6] : memref<32x128xbf16, #tpu.memory_space<vmem>>, vector<32x128xbf16>
    %cst_7 = arith.constant dense<0.000000e+00> : vector<8x128xf32>
    %8 = tpu.matmul %6, %7, %cst_7 {dimension_numbers = #tpu.dot_dimension_numbers<[1], [0], [0], [1], [0, 0, 1, 1], [], []>} : vector<8x32xbf16>, vector<32x128xbf16>, vector<8x128xf32> -> vector<8x128xf32>
    %9 = arith.addf %5, %8 : vector<8x128xf32>
    %10 = vector.extract_strided_slice %9 {offsets = [0, 0], sizes = [8, 96], strides = [1, 1]} : vector<8x128xf32> to vector<8x96xf32>
    %11 = arith.negf %10 : vector<8x96xf32>
    %12 = math.exp %11 : vector<8x96xf32>
    %cst_8 = arith.constant 1.000000e+00 : f32
    %13 = vector.broadcast %cst_8 : f32 to vector<8x96xf32>
    %14 = arith.addf %13, %12 : vector<8x96xf32>
    %15 = arith.divf %13, %14 : vector<8x96xf32>
    %16 = vector.extract_strided_slice %9 {offsets = [0, 96], sizes = [8, 32], strides = [1, 1]} : vector<8x128xf32> to vector<8x32xf32>
    %17 = math.tanh %16 : vector<8x32xf32>
    %18 = vector.extract_strided_slice %15 {offsets = [0, 0], sizes = [8, 32], strides = [1, 1]} : vector<8x96xf32> to vector<8x32xf32>
    %19 = vector.extract_strided_slice %15 {offsets = [0, 32], sizes = [8, 32], strides = [1, 1]} : vector<8x96xf32> to vector<8x32xf32>
    %20 = vector.extract_strided_slice %15 {offsets = [0, 64], sizes = [8, 32], strides = [1, 1]} : vector<8x96xf32> to vector<8x32xf32>
    %21 = arith.mulf %19, %2 : vector<8x32xf32>
    %22 = arith.mulf %18, %17 : vector<8x32xf32>
    %23 = arith.addf %21, %22 : vector<8x32xf32>
    %24 = math.tanh %23 : vector<8x32xf32>
    %25 = arith.mulf %20, %24 : vector<8x32xf32>
    %c1 = arith.constant 1 : index
    %c0_9 = arith.constant 0 : index
    %c0_10 = arith.constant 0 : index
    %26 = vector.load %arg0[%c1, %c0_9, %c0_10] : memref<8x8x128xf32, #tpu.memory_space<vmem>>, vector<1x8x128xf32>
    %27 = vector.shape_cast %26 : vector<1x8x128xf32> to vector<8x128xf32>
    %28 = arith.truncf %25 : vector<8x32xf32> to vector<8x32xbf16>
    %c0_11 = arith.constant 0 : index
    %c0_12 = arith.constant 0 : index
    %29 = vector.load %arg1[%c0_11, %c0_12] : memref<32x128xbf16, #tpu.memory_space<vmem>>, vector<32x128xbf16>
    %cst_13 = arith.constant dense<0.000000e+00> : vector<8x128xf32>
    %30 = tpu.matmul %28, %29, %cst_13 {dimension_numbers = #tpu.dot_dimension_numbers<[1], [0], [0], [1], [0, 0, 1, 1], [], []>} : vector<8x32xbf16>, vector<32x128xbf16>, vector<8x128xf32> -> vector<8x128xf32>
    %31 = arith.addf %27, %30 : vector<8x128xf32>
    %32 = vector.extract_strided_slice %31 {offsets = [0, 0], sizes = [8, 96], strides = [1, 1]} : vector<8x128xf32> to vector<8x96xf32>
    %33 = arith.negf %32 : vector<8x96xf32>
    %34 = math.exp %33 : vector<8x96xf32>
    %cst_14 = arith.constant 1.000000e+00 : f32
    %35 = vector.broadcast %cst_14 : f32 to vector<8x96xf32>
    %36 = arith.addf %35, %34 : vector<8x96xf32>
    %37 = arith.divf %35, %36 : vector<8x96xf32>
    %38 = vector.extract_strided_slice %31 {offsets = [0, 96], sizes = [8, 32], strides = [1, 1]} : vector<8x128xf32> to vector<8x32xf32>
    %39 = math.tanh %38 : vector<8x32xf32>
    %40 = vector.extract_strided_slice %37 {offsets = [0, 0], sizes = [8, 32], strides = [1, 1]} : vector<8x96xf32> to vector<8x32xf32>
    %41 = vector.extract_strided_slice %37 {offsets = [0, 32], sizes = [8, 32], strides = [1, 1]} : vector<8x96xf32> to vector<8x32xf32>
    %42 = vector.extract_strided_slice %37 {offsets = [0, 64], sizes = [8, 32], strides = [1, 1]} : vector<8x96xf32> to vector<8x32xf32>
    %43 = arith.mulf %41, %23 : vector<8x32xf32>
    %44 = arith.mulf %40, %39 : vector<8x32xf32>
    %45 = arith.addf %43, %44 : vector<8x32xf32>
    %46 = math.tanh %45 : vector<8x32xf32>
    %47 = arith.mulf %42, %46 : vector<8x32xf32>
    %48 = tpu.concatenate %25, %1 in 1 : vector<8x32xf32>, vector<8x32xf32> -> vector<8x64xf32>
    %49 = arith.truncf %48 : vector<8x64xf32> to vector<8x64xbf16>
    %c0_15 = arith.constant 0 : index
    %c0_16 = arith.constant 0 : index
    %c0_17 = arith.constant 0 : index
    %50 = vector.load %arg2[%c0_15, %c0_16, %c0_17] : memref<1x64x128xbf16, #tpu.memory_space<vmem>>, vector<1x64x128xbf16>
    %51 = vector.shape_cast %50 : vector<1x64x128xbf16> to vector<64x128xbf16>
    %cst_18 = arith.constant dense<0.000000e+00> : vector<8x128xf32>
    %52 = tpu.matmul %49, %51, %cst_18 {dimension_numbers = #tpu.dot_dimension_numbers<[1], [0], [0], [1], [0, 0, 1, 1], [], []>} : vector<8x64xbf16>, vector<64x128xbf16>, vector<8x128xf32> -> vector<8x128xf32>
    %c0_19 = arith.constant 0 : index
    %c0_20 = arith.constant 0 : index
    %c0_21 = arith.constant 0 : index
    %53 = vector.load %arg3[%c0_19, %c0_20, %c0_21] : memref<1x1x128xf32, #tpu.memory_space<vmem>>, vector<1x1x128xf32>
    %54 = vector.shape_cast %53 : vector<1x1x128xf32> to vector<1x128xf32>
    %55 = vector.broadcast %54 : vector<1x128xf32> to vector<8x128xf32>
    %56 = arith.addf %52, %55 : vector<8x128xf32>
    %57 = vector.extract_strided_slice %56 {offsets = [0, 0], sizes = [8, 96], strides = [1, 1]} : vector<8x128xf32> to vector<8x96xf32>
    %58 = arith.negf %57 : vector<8x96xf32>
    %59 = math.exp %58 : vector<8x96xf32>
    %cst_22 = arith.constant 1.000000e+00 : f32
    %60 = vector.broadcast %cst_22 : f32 to vector<8x96xf32>
    %61 = arith.addf %60, %59 : vector<8x96xf32>
    %62 = arith.divf %60, %61 : vector<8x96xf32>
    %63 = vector.extract_strided_slice %56 {offsets = [0, 96], sizes = [8, 32], strides = [1, 1]} : vector<8x128xf32> to vector<8x32xf32>
    %64 = math.tanh %63 : vector<8x32xf32>
    %65 = vector.extract_strided_slice %62 {offsets = [0, 0], sizes = [8, 32], strides = [1, 1]} : vector<8x96xf32> to vector<8x32xf32>
    %66 = vector.extract_strided_slice %62 {offsets = [0, 32], sizes = [8, 32], strides = [1, 1]} : vector<8x96xf32> to vector<8x32xf32>
    %67 = vector.extract_strided_slice %62 {offsets = [0, 64], sizes = [8, 32], strides = [1, 1]} : vector<8x96xf32> to vector<8x32xf32>
    %68 = arith.mulf %66, %3 : vector<8x32xf32>
    %69 = arith.mulf %65, %64 : vector<8x32xf32>
    %70 = arith.addf %68, %69 : vector<8x32xf32>
    %71 = math.tanh %70 : vector<8x32xf32>
    %72 = arith.mulf %67, %71 : vector<8x32xf32>
    %c2 = arith.constant 2 : index
    %c0_23 = arith.constant 0 : index
    %c0_24 = arith.constant 0 : index
    %73 = vector.load %arg0[%c2, %c0_23, %c0_24] : memref<8x8x128xf32, #tpu.memory_space<vmem>>, vector<1x8x128xf32>
    %74 = vector.shape_cast %73 : vector<1x8x128xf32> to vector<8x128xf32>
    %75 = arith.truncf %47 : vector<8x32xf32> to vector<8x32xbf16>
    %c0_25 = arith.constant 0 : index
    %c0_26 = arith.constant 0 : index
    %76 = vector.load %arg1[%c0_25, %c0_26] : memref<32x128xbf16, #tpu.memory_space<vmem>>, vector<32x128xbf16>
    %cst_27 = arith.constant dense<0.000000e+00> : vector<8x128xf32>
    %77 = tpu.matmul %75, %76, %cst_27 {dimension_numbers = #tpu.dot_dimension_numbers<[1], [0], [0], [1], [0, 0, 1, 1], [], []>} : vector<8x32xbf16>, vector<32x128xbf16>, vector<8x128xf32> -> vector<8x128xf32>
    %78 = arith.addf %74, %77 : vector<8x128xf32>
    %79 = vector.extract_strided_slice %78 {offsets = [0, 0], sizes = [8, 96], strides = [1, 1]} : vector<8x128xf32> to vector<8x96xf32>
    %80 = arith.negf %79 : vector<8x96xf32>
    %81 = math.exp %80 : vector<8x96xf32>
    %cst_28 = arith.constant 1.000000e+00 : f32
    %82 = vector.broadcast %cst_28 : f32 to vector<8x96xf32>
    %83 = arith.addf %82, %81 : vector<8x96xf32>
    %84 = arith.divf %82, %83 : vector<8x96xf32>
    %85 = vector.extract_strided_slice %78 {offsets = [0, 96], sizes = [8, 32], strides = [1, 1]} : vector<8x128xf32> to vector<8x32xf32>
    %86 = math.tanh %85 : vector<8x32xf32>
    %87 = vector.extract_strided_slice %84 {offsets = [0, 0], sizes = [8, 32], strides = [1, 1]} : vector<8x96xf32> to vector<8x32xf32>
    %88 = vector.extract_strided_slice %84 {offsets = [0, 32], sizes = [8, 32], strides = [1, 1]} : vector<8x96xf32> to vector<8x32xf32>
    %89 = vector.extract_strided_slice %84 {offsets = [0, 64], sizes = [8, 32], strides = [1, 1]} : vector<8x96xf32> to vector<8x32xf32>
    %90 = arith.mulf %88, %45 : vector<8x32xf32>
    %91 = arith.mulf %87, %86 : vector<8x32xf32>
    %92 = arith.addf %90, %91 : vector<8x32xf32>
    %93 = math.tanh %92 : vector<8x32xf32>
    %94 = arith.mulf %89, %93 : vector<8x32xf32>
    %95 = tpu.concatenate %47, %72 in 1 : vector<8x32xf32>, vector<8x32xf32> -> vector<8x64xf32>
    %96 = arith.truncf %95 : vector<8x64xf32> to vector<8x64xbf16>
    %c0_29 = arith.constant 0 : index
    %c0_30 = arith.constant 0 : index
    %c0_31 = arith.constant 0 : index
    %97 = vector.load %arg2[%c0_29, %c0_30, %c0_31] : memref<1x64x128xbf16, #tpu.memory_space<vmem>>, vector<1x64x128xbf16>
    %98 = vector.shape_cast %97 : vector<1x64x128xbf16> to vector<64x128xbf16>
    %cst_32 = arith.constant dense<0.000000e+00> : vector<8x128xf32>
    %99 = tpu.matmul %96, %98, %cst_32 {dimension_numbers = #tpu.dot_dimension_numbers<[1], [0], [0], [1], [0, 0, 1, 1], [], []>} : vector<8x64xbf16>, vector<64x128xbf16>, vector<8x128xf32> -> vector<8x128xf32>
    %c0_33 = arith.constant 0 : index
    %c0_34 = arith.constant 0 : index
    %c0_35 = arith.constant 0 : index
    %100 = vector.load %arg3[%c0_33, %c0_34, %c0_35] : memref<1x1x128xf32, #tpu.memory_space<vmem>>, vector<1x1x128xf32>
    %101 = vector.shape_cast %100 : vector<1x1x128xf32> to vector<1x128xf32>
    %102 = vector.broadcast %101 : vector<1x128xf32> to vector<8x128xf32>
    %103 = arith.addf %99, %102 : vector<8x128xf32>
    %104 = vector.extract_strided_slice %103 {offsets = [0, 0], sizes = [8, 96], strides = [1, 1]} : vector<8x128xf32> to vector<8x96xf32>
    %105 = arith.negf %104 : vector<8x96xf32>
    %106 = math.exp %105 : vector<8x96xf32>
    %cst_36 = arith.constant 1.000000e+00 : f32
    %107 = vector.broadcast %cst_36 : f32 to vector<8x96xf32>
    %108 = arith.addf %107, %106 : vector<8x96xf32>
    %109 = arith.divf %107, %108 : vector<8x96xf32>
    %110 = vector.extract_strided_slice %103 {offsets = [0, 96], sizes = [8, 32], strides = [1, 1]} : vector<8x128xf32> to vector<8x32xf32>
    %111 = math.tanh %110 : vector<8x32xf32>
    %112 = vector.extract_strided_slice %109 {offsets = [0, 0], sizes = [8, 32], strides = [1, 1]} : vector<8x96xf32> to vector<8x32xf32>
    %113 = vector.extract_strided_slice %109 {offsets = [0, 32], sizes = [8, 32], strides = [1, 1]} : vector<8x96xf32> to vector<8x32xf32>
    %114 = vector.extract_strided_slice %109 {offsets = [0, 64], sizes = [8, 32], strides = [1, 1]} : vector<8x96xf32> to vector<8x32xf32>
    %115 = arith.mulf %113, %70 : vector<8x32xf32>
    %116 = arith.mulf %112, %111 : vector<8x32xf32>
    %117 = arith.addf %115, %116 : vector<8x32xf32>
    %118 = math.tanh %117 : vector<8x32xf32>
    %119 = arith.mulf %114, %118 : vector<8x32xf32>
    %c3 = arith.constant 3 : index
    %c0_37 = arith.constant 0 : index
    %c0_38 = arith.constant 0 : index
    %120 = vector.load %arg0[%c3, %c0_37, %c0_38] : memref<8x8x128xf32, #tpu.memory_space<vmem>>, vector<1x8x128xf32>
    %121 = vector.shape_cast %120 : vector<1x8x128xf32> to vector<8x128xf32>
    %122 = arith.truncf %94 : vector<8x32xf32> to vector<8x32xbf16>
    %c0_39 = arith.constant 0 : index
    %c0_40 = arith.constant 0 : index
    %123 = vector.load %arg1[%c0_39, %c0_40] : memref<32x128xbf16, #tpu.memory_space<vmem>>, vector<32x128xbf16>
    %cst_41 = arith.constant dense<0.000000e+00> : vector<8x128xf32>
    %124 = tpu.matmul %122, %123, %cst_41 {dimension_numbers = #tpu.dot_dimension_numbers<[1], [0], [0], [1], [0, 0, 1, 1], [], []>} : vector<8x32xbf16>, vector<32x128xbf16>, vector<8x128xf32> -> vector<8x128xf32>
    %125 = arith.addf %121, %124 : vector<8x128xf32>
    %126 = vector.extract_strided_slice %125 {offsets = [0, 0], sizes = [8, 96], strides = [1, 1]} : vector<8x128xf32> to vector<8x96xf32>
    %127 = arith.negf %126 : vector<8x96xf32>
    %128 = math.exp %127 : vector<8x96xf32>
    %cst_42 = arith.constant 1.000000e+00 : f32
    %129 = vector.broadcast %cst_42 : f32 to vector<8x96xf32>
    %130 = arith.addf %129, %128 : vector<8x96xf32>
    %131 = arith.divf %129, %130 : vector<8x96xf32>
    %132 = vector.extract_strided_slice %125 {offsets = [0, 96], sizes = [8, 32], strides = [1, 1]} : vector<8x128xf32> to vector<8x32xf32>
    %133 = math.tanh %132 : vector<8x32xf32>
    %134 = vector.extract_strided_slice %131 {offsets = [0, 0], sizes = [8, 32], strides = [1, 1]} : vector<8x96xf32> to vector<8x32xf32>
    %135 = vector.extract_strided_slice %131 {offsets = [0, 32], sizes = [8, 32], strides = [1, 1]} : vector<8x96xf32> to vector<8x32xf32>
    %136 = vector.extract_strided_slice %131 {offsets = [0, 64], sizes = [8, 32], strides = [1, 1]} : vector<8x96xf32> to vector<8x32xf32>
    %137 = arith.mulf %135, %92 : vector<8x32xf32>
    %138 = arith.mulf %134, %133 : vector<8x32xf32>
    %139 = arith.addf %137, %138 : vector<8x32xf32>
    %140 = math.tanh %139 : vector<8x32xf32>
    %141 = arith.mulf %136, %140 : vector<8x32xf32>
    %142 = tpu.concatenate %94, %119 in 1 : vector<8x32xf32>, vector<8x32xf32> -> vector<8x64xf32>
    %143 = arith.truncf %142 : vector<8x64xf32> to vector<8x64xbf16>
    %c0_43 = arith.constant 0 : index
    %c0_44 = arith.constant 0 : index
    %c0_45 = arith.constant 0 : index
    %144 = vector.load %arg2[%c0_43, %c0_44, %c0_45] : memref<1x64x128xbf16, #tpu.memory_space<vmem>>, vector<1x64x128xbf16>
    %145 = vector.shape_cast %144 : vector<1x64x128xbf16> to vector<64x128xbf16>
    %cst_46 = arith.constant dense<0.000000e+00> : vector<8x128xf32>
    %146 = tpu.matmul %143, %145, %cst_46 {dimension_numbers = #tpu.dot_dimension_numbers<[1], [0], [0], [1], [0, 0, 1, 1], [], []>} : vector<8x64xbf16>, vector<64x128xbf16>, vector<8x128xf32> -> vector<8x128xf32>
    %c0_47 = arith.constant 0 : index
    %c0_48 = arith.constant 0 : index
    %c0_49 = arith.constant 0 : index
    %147 = vector.load %arg3[%c0_47, %c0_48, %c0_49] : memref<1x1x128xf32, #tpu.memory_space<vmem>>, vector<1x1x128xf32>
    %148 = vector.shape_cast %147 : vector<1x1x128xf32> to vector<1x128xf32>
    %149 = vector.broadcast %148 : vector<1x128xf32> to vector<8x128xf32>
    %150 = arith.addf %146, %149 : vector<8x128xf32>
    %151 = vector.extract_strided_slice %150 {offsets = [0, 0], sizes = [8, 96], strides = [1, 1]} : vector<8x128xf32> to vector<8x96xf32>
    %152 = arith.negf %151 : vector<8x96xf32>
    %153 = math.exp %152 : vector<8x96xf32>
    %cst_50 = arith.constant 1.000000e+00 : f32
    %154 = vector.broadcast %cst_50 : f32 to vector<8x96xf32>
    %155 = arith.addf %154, %153 : vector<8x96xf32>
    %156 = arith.divf %154, %155 : vector<8x96xf32>
    %157 = vector.extract_strided_slice %150 {offsets = [0, 96], sizes = [8, 32], strides = [1, 1]} : vector<8x128xf32> to vector<8x32xf32>
    %158 = math.tanh %157 : vector<8x32xf32>
    %159 = vector.extract_strided_slice %156 {offsets = [0, 0], sizes = [8, 32], strides = [1, 1]} : vector<8x96xf32> to vector<8x32xf32>
    %160 = vector.extract_strided_slice %156 {offsets = [0, 32], sizes = [8, 32], strides = [1, 1]} : vector<8x96xf32> to vector<8x32xf32>
    %161 = vector.extract_strided_slice %156 {offsets = [0, 64], sizes = [8, 32], strides = [1, 1]} : vector<8x96xf32> to vector<8x32xf32>
    %162 = arith.mulf %160, %117 : vector<8x32xf32>
    %163 = arith.mulf %159, %158 : vector<8x32xf32>
    %164 = arith.addf %162, %163 : vector<8x32xf32>
    %165 = math.tanh %164 : vector<8x32xf32>
    %166 = arith.mulf %161, %165 : vector<8x32xf32>
    %c4 = arith.constant 4 : index
    %c0_51 = arith.constant 0 : index
    %c0_52 = arith.constant 0 : index
    %167 = vector.load %arg0[%c4, %c0_51, %c0_52] : memref<8x8x128xf32, #tpu.memory_space<vmem>>, vector<1x8x128xf32>
    %168 = vector.shape_cast %167 : vector<1x8x128xf32> to vector<8x128xf32>
    %169 = arith.truncf %141 : vector<8x32xf32> to vector<8x32xbf16>
    %c0_53 = arith.constant 0 : index
    %c0_54 = arith.constant 0 : index
    %170 = vector.load %arg1[%c0_53, %c0_54] : memref<32x128xbf16, #tpu.memory_space<vmem>>, vector<32x128xbf16>
    %cst_55 = arith.constant dense<0.000000e+00> : vector<8x128xf32>
    %171 = tpu.matmul %169, %170, %cst_55 {dimension_numbers = #tpu.dot_dimension_numbers<[1], [0], [0], [1], [0, 0, 1, 1], [], []>} : vector<8x32xbf16>, vector<32x128xbf16>, vector<8x128xf32> -> vector<8x128xf32>
    %172 = arith.addf %168, %171 : vector<8x128xf32>
    %173 = vector.extract_strided_slice %172 {offsets = [0, 0], sizes = [8, 96], strides = [1, 1]} : vector<8x128xf32> to vector<8x96xf32>
    %174 = arith.negf %173 : vector<8x96xf32>
    %175 = math.exp %174 : vector<8x96xf32>
    %cst_56 = arith.constant 1.000000e+00 : f32
    %176 = vector.broadcast %cst_56 : f32 to vector<8x96xf32>
    %177 = arith.addf %176, %175 : vector<8x96xf32>
    %178 = arith.divf %176, %177 : vector<8x96xf32>
    %179 = vector.extract_strided_slice %172 {offsets = [0, 96], sizes = [8, 32], strides = [1, 1]} : vector<8x128xf32> to vector<8x32xf32>
    %180 = math.tanh %179 : vector<8x32xf32>
    %181 = vector.extract_strided_slice %178 {offsets = [0, 0], sizes = [8, 32], strides = [1, 1]} : vector<8x96xf32> to vector<8x32xf32>
    %182 = vector.extract_strided_slice %178 {offsets = [0, 32], sizes = [8, 32], strides = [1, 1]} : vector<8x96xf32> to vector<8x32xf32>
    %183 = vector.extract_strided_slice %178 {offsets = [0, 64], sizes = [8, 32], strides = [1, 1]} : vector<8x96xf32> to vector<8x32xf32>
    %184 = arith.mulf %182, %139 : vector<8x32xf32>
    %185 = arith.mulf %181, %180 : vector<8x32xf32>
    %186 = arith.addf %184, %185 : vector<8x32xf32>
    %187 = math.tanh %186 : vector<8x32xf32>
    %188 = arith.mulf %183, %187 : vector<8x32xf32>
    %189 = tpu.concatenate %141, %166 in 1 : vector<8x32xf32>, vector<8x32xf32> -> vector<8x64xf32>
    %190 = arith.truncf %189 : vector<8x64xf32> to vector<8x64xbf16>
    %c0_57 = arith.constant 0 : index
    %c0_58 = arith.constant 0 : index
    %c0_59 = arith.constant 0 : index
    %191 = vector.load %arg2[%c0_57, %c0_58, %c0_59] : memref<1x64x128xbf16, #tpu.memory_space<vmem>>, vector<1x64x128xbf16>
    %192 = vector.shape_cast %191 : vector<1x64x128xbf16> to vector<64x128xbf16>
    %cst_60 = arith.constant dense<0.000000e+00> : vector<8x128xf32>
    %193 = tpu.matmul %190, %192, %cst_60 {dimension_numbers = #tpu.dot_dimension_numbers<[1], [0], [0], [1], [0, 0, 1, 1], [], []>} : vector<8x64xbf16>, vector<64x128xbf16>, vector<8x128xf32> -> vector<8x128xf32>
    %c0_61 = arith.constant 0 : index
    %c0_62 = arith.constant 0 : index
    %c0_63 = arith.constant 0 : index
    %194 = vector.load %arg3[%c0_61, %c0_62, %c0_63] : memref<1x1x128xf32, #tpu.memory_space<vmem>>, vector<1x1x128xf32>
    %195 = vector.shape_cast %194 : vector<1x1x128xf32> to vector<1x128xf32>
    %196 = vector.broadcast %195 : vector<1x128xf32> to vector<8x128xf32>
    %197 = arith.addf %193, %196 : vector<8x128xf32>
    %198 = vector.extract_strided_slice %197 {offsets = [0, 0], sizes = [8, 96], strides = [1, 1]} : vector<8x128xf32> to vector<8x96xf32>
    %199 = arith.negf %198 : vector<8x96xf32>
    %200 = math.exp %199 : vector<8x96xf32>
    %cst_64 = arith.constant 1.000000e+00 : f32
    %201 = vector.broadcast %cst_64 : f32 to vector<8x96xf32>
    %202 = arith.addf %201, %200 : vector<8x96xf32>
    %203 = arith.divf %201, %202 : vector<8x96xf32>
    %204 = vector.extract_strided_slice %197 {offsets = [0, 96], sizes = [8, 32], strides = [1, 1]} : vector<8x128xf32> to vector<8x32xf32>
    %205 = math.tanh %204 : vector<8x32xf32>
    %206 = vector.extract_strided_slice %203 {offsets = [0, 0], sizes = [8, 32], strides = [1, 1]} : vector<8x96xf32> to vector<8x32xf32>
    %207 = vector.extract_strided_slice %203 {offsets = [0, 32], sizes = [8, 32], strides = [1, 1]} : vector<8x96xf32> to vector<8x32xf32>
    %208 = vector.extract_strided_slice %203 {offsets = [0, 64], sizes = [8, 32], strides = [1, 1]} : vector<8x96xf32> to vector<8x32xf32>
    %209 = arith.mulf %207, %164 : vector<8x32xf32>
    %210 = arith.mulf %206, %205 : vector<8x32xf32>
    %211 = arith.addf %209, %210 : vector<8x32xf32>
    %212 = math.tanh %211 : vector<8x32xf32>
    %213 = arith.mulf %208, %212 : vector<8x32xf32>
    %c5 = arith.constant 5 : index
    %c0_65 = arith.constant 0 : index
    %c0_66 = arith.constant 0 : index
    %214 = vector.load %arg0[%c5, %c0_65, %c0_66] : memref<8x8x128xf32, #tpu.memory_space<vmem>>, vector<1x8x128xf32>
    %215 = vector.shape_cast %214 : vector<1x8x128xf32> to vector<8x128xf32>
    %216 = arith.truncf %188 : vector<8x32xf32> to vector<8x32xbf16>
    %c0_67 = arith.constant 0 : index
    %c0_68 = arith.constant 0 : index
    %217 = vector.load %arg1[%c0_67, %c0_68] : memref<32x128xbf16, #tpu.memory_space<vmem>>, vector<32x128xbf16>
    %cst_69 = arith.constant dense<0.000000e+00> : vector<8x128xf32>
    %218 = tpu.matmul %216, %217, %cst_69 {dimension_numbers = #tpu.dot_dimension_numbers<[1], [0], [0], [1], [0, 0, 1, 1], [], []>} : vector<8x32xbf16>, vector<32x128xbf16>, vector<8x128xf32> -> vector<8x128xf32>
    %219 = arith.addf %215, %218 : vector<8x128xf32>
    %220 = vector.extract_strided_slice %219 {offsets = [0, 0], sizes = [8, 96], strides = [1, 1]} : vector<8x128xf32> to vector<8x96xf32>
    %221 = arith.negf %220 : vector<8x96xf32>
    %222 = math.exp %221 : vector<8x96xf32>
    %cst_70 = arith.constant 1.000000e+00 : f32
    %223 = vector.broadcast %cst_70 : f32 to vector<8x96xf32>
    %224 = arith.addf %223, %222 : vector<8x96xf32>
    %225 = arith.divf %223, %224 : vector<8x96xf32>
    %226 = vector.extract_strided_slice %219 {offsets = [0, 96], sizes = [8, 32], strides = [1, 1]} : vector<8x128xf32> to vector<8x32xf32>
    %227 = math.tanh %226 : vector<8x32xf32>
    %228 = vector.extract_strided_slice %225 {offsets = [0, 0], sizes = [8, 32], strides = [1, 1]} : vector<8x96xf32> to vector<8x32xf32>
    %229 = vector.extract_strided_slice %225 {offsets = [0, 32], sizes = [8, 32], strides = [1, 1]} : vector<8x96xf32> to vector<8x32xf32>
    %230 = vector.extract_strided_slice %225 {offsets = [0, 64], sizes = [8, 32], strides = [1, 1]} : vector<8x96xf32> to vector<8x32xf32>
    %231 = arith.mulf %229, %186 : vector<8x32xf32>
    %232 = arith.mulf %228, %227 : vector<8x32xf32>
    %233 = arith.addf %231, %232 : vector<8x32xf32>
    %234 = math.tanh %233 : vector<8x32xf32>
    %235 = arith.mulf %230, %234 : vector<8x32xf32>
    %236 = tpu.concatenate %188, %213 in 1 : vector<8x32xf32>, vector<8x32xf32> -> vector<8x64xf32>
    %237 = arith.truncf %236 : vector<8x64xf32> to vector<8x64xbf16>
    %c0_71 = arith.constant 0 : index
    %c0_72 = arith.constant 0 : index
    %c0_73 = arith.constant 0 : index
    %238 = vector.load %arg2[%c0_71, %c0_72, %c0_73] : memref<1x64x128xbf16, #tpu.memory_space<vmem>>, vector<1x64x128xbf16>
    %239 = vector.shape_cast %238 : vector<1x64x128xbf16> to vector<64x128xbf16>
    %cst_74 = arith.constant dense<0.000000e+00> : vector<8x128xf32>
    %240 = tpu.matmul %237, %239, %cst_74 {dimension_numbers = #tpu.dot_dimension_numbers<[1], [0], [0], [1], [0, 0, 1, 1], [], []>} : vector<8x64xbf16>, vector<64x128xbf16>, vector<8x128xf32> -> vector<8x128xf32>
    %c0_75 = arith.constant 0 : index
    %c0_76 = arith.constant 0 : index
    %c0_77 = arith.constant 0 : index
    %241 = vector.load %arg3[%c0_75, %c0_76, %c0_77] : memref<1x1x128xf32, #tpu.memory_space<vmem>>, vector<1x1x128xf32>
    %242 = vector.shape_cast %241 : vector<1x1x128xf32> to vector<1x128xf32>
    %243 = vector.broadcast %242 : vector<1x128xf32> to vector<8x128xf32>
    %244 = arith.addf %240, %243 : vector<8x128xf32>
    %245 = vector.extract_strided_slice %244 {offsets = [0, 0], sizes = [8, 96], strides = [1, 1]} : vector<8x128xf32> to vector<8x96xf32>
    %246 = arith.negf %245 : vector<8x96xf32>
    %247 = math.exp %246 : vector<8x96xf32>
    %cst_78 = arith.constant 1.000000e+00 : f32
    %248 = vector.broadcast %cst_78 : f32 to vector<8x96xf32>
    %249 = arith.addf %248, %247 : vector<8x96xf32>
    %250 = arith.divf %248, %249 : vector<8x96xf32>
    %251 = vector.extract_strided_slice %244 {offsets = [0, 96], sizes = [8, 32], strides = [1, 1]} : vector<8x128xf32> to vector<8x32xf32>
    %252 = math.tanh %251 : vector<8x32xf32>
    %253 = vector.extract_strided_slice %250 {offsets = [0, 0], sizes = [8, 32], strides = [1, 1]} : vector<8x96xf32> to vector<8x32xf32>
    %254 = vector.extract_strided_slice %250 {offsets = [0, 32], sizes = [8, 32], strides = [1, 1]} : vector<8x96xf32> to vector<8x32xf32>
    %255 = vector.extract_strided_slice %250 {offsets = [0, 64], sizes = [8, 32], strides = [1, 1]} : vector<8x96xf32> to vector<8x32xf32>
    %256 = arith.mulf %254, %211 : vector<8x32xf32>
    %257 = arith.mulf %253, %252 : vector<8x32xf32>
    %258 = arith.addf %256, %257 : vector<8x32xf32>
    %259 = math.tanh %258 : vector<8x32xf32>
    %260 = arith.mulf %255, %259 : vector<8x32xf32>
    %c6 = arith.constant 6 : index
    %c0_79 = arith.constant 0 : index
    %c0_80 = arith.constant 0 : index
    %261 = vector.load %arg0[%c6, %c0_79, %c0_80] : memref<8x8x128xf32, #tpu.memory_space<vmem>>, vector<1x8x128xf32>
    %262 = vector.shape_cast %261 : vector<1x8x128xf32> to vector<8x128xf32>
    %263 = arith.truncf %235 : vector<8x32xf32> to vector<8x32xbf16>
    %c0_81 = arith.constant 0 : index
    %c0_82 = arith.constant 0 : index
    %264 = vector.load %arg1[%c0_81, %c0_82] : memref<32x128xbf16, #tpu.memory_space<vmem>>, vector<32x128xbf16>
    %cst_83 = arith.constant dense<0.000000e+00> : vector<8x128xf32>
    %265 = tpu.matmul %263, %264, %cst_83 {dimension_numbers = #tpu.dot_dimension_numbers<[1], [0], [0], [1], [0, 0, 1, 1], [], []>} : vector<8x32xbf16>, vector<32x128xbf16>, vector<8x128xf32> -> vector<8x128xf32>
    %266 = arith.addf %262, %265 : vector<8x128xf32>
    %267 = vector.extract_strided_slice %266 {offsets = [0, 0], sizes = [8, 96], strides = [1, 1]} : vector<8x128xf32> to vector<8x96xf32>
    %268 = arith.negf %267 : vector<8x96xf32>
    %269 = math.exp %268 : vector<8x96xf32>
    %cst_84 = arith.constant 1.000000e+00 : f32
    %270 = vector.broadcast %cst_84 : f32 to vector<8x96xf32>
    %271 = arith.addf %270, %269 : vector<8x96xf32>
    %272 = arith.divf %270, %271 : vector<8x96xf32>
    %273 = vector.extract_strided_slice %266 {offsets = [0, 96], sizes = [8, 32], strides = [1, 1]} : vector<8x128xf32> to vector<8x32xf32>
    %274 = math.tanh %273 : vector<8x32xf32>
    %275 = vector.extract_strided_slice %272 {offsets = [0, 0], sizes = [8, 32], strides = [1, 1]} : vector<8x96xf32> to vector<8x32xf32>
    %276 = vector.extract_strided_slice %272 {offsets = [0, 32], sizes = [8, 32], strides = [1, 1]} : vector<8x96xf32> to vector<8x32xf32>
    %277 = vector.extract_strided_slice %272 {offsets = [0, 64], sizes = [8, 32], strides = [1, 1]} : vector<8x96xf32> to vector<8x32xf32>
    %278 = arith.mulf %276, %233 : vector<8x32xf32>
    %279 = arith.mulf %275, %274 : vector<8x32xf32>
    %280 = arith.addf %278, %279 : vector<8x32xf32>
    %281 = math.tanh %280 : vector<8x32xf32>
    %282 = arith.mulf %277, %281 : vector<8x32xf32>
    %283 = tpu.concatenate %235, %260 in 1 : vector<8x32xf32>, vector<8x32xf32> -> vector<8x64xf32>
    %284 = arith.truncf %283 : vector<8x64xf32> to vector<8x64xbf16>
    %c0_85 = arith.constant 0 : index
    %c0_86 = arith.constant 0 : index
    %c0_87 = arith.constant 0 : index
    %285 = vector.load %arg2[%c0_85, %c0_86, %c0_87] : memref<1x64x128xbf16, #tpu.memory_space<vmem>>, vector<1x64x128xbf16>
    %286 = vector.shape_cast %285 : vector<1x64x128xbf16> to vector<64x128xbf16>
    %cst_88 = arith.constant dense<0.000000e+00> : vector<8x128xf32>
    %287 = tpu.matmul %284, %286, %cst_88 {dimension_numbers = #tpu.dot_dimension_numbers<[1], [0], [0], [1], [0, 0, 1, 1], [], []>} : vector<8x64xbf16>, vector<64x128xbf16>, vector<8x128xf32> -> vector<8x128xf32>
    %c0_89 = arith.constant 0 : index
    %c0_90 = arith.constant 0 : index
    %c0_91 = arith.constant 0 : index
    %288 = vector.load %arg3[%c0_89, %c0_90, %c0_91] : memref<1x1x128xf32, #tpu.memory_space<vmem>>, vector<1x1x128xf32>
    %289 = vector.shape_cast %288 : vector<1x1x128xf32> to vector<1x128xf32>
    %290 = vector.broadcast %289 : vector<1x128xf32> to vector<8x128xf32>
    %291 = arith.addf %287, %290 : vector<8x128xf32>
    %292 = vector.extract_strided_slice %291 {offsets = [0, 0], sizes = [8, 96], strides = [1, 1]} : vector<8x128xf32> to vector<8x96xf32>
    %293 = arith.negf %292 : vector<8x96xf32>
    %294 = math.exp %293 : vector<8x96xf32>
    %cst_92 = arith.constant 1.000000e+00 : f32
    %295 = vector.broadcast %cst_92 : f32 to vector<8x96xf32>
    %296 = arith.addf %295, %294 : vector<8x96xf32>
    %297 = arith.divf %295, %296 : vector<8x96xf32>
    %298 = vector.extract_strided_slice %291 {offsets = [0, 96], sizes = [8, 32], strides = [1, 1]} : vector<8x128xf32> to vector<8x32xf32>
    %299 = math.tanh %298 : vector<8x32xf32>
    %300 = vector.extract_strided_slice %297 {offsets = [0, 0], sizes = [8, 32], strides = [1, 1]} : vector<8x96xf32> to vector<8x32xf32>
    %301 = vector.extract_strided_slice %297 {offsets = [0, 32], sizes = [8, 32], strides = [1, 1]} : vector<8x96xf32> to vector<8x32xf32>
    %302 = vector.extract_strided_slice %297 {offsets = [0, 64], sizes = [8, 32], strides = [1, 1]} : vector<8x96xf32> to vector<8x32xf32>
    %303 = arith.mulf %301, %258 : vector<8x32xf32>
    %304 = arith.mulf %300, %299 : vector<8x32xf32>
    %305 = arith.addf %303, %304 : vector<8x32xf32>
    %306 = math.tanh %305 : vector<8x32xf32>
    %307 = arith.mulf %302, %306 : vector<8x32xf32>
    %c7 = arith.constant 7 : index
    %c0_93 = arith.constant 0 : index
    %c0_94 = arith.constant 0 : index
    %308 = vector.load %arg0[%c7, %c0_93, %c0_94] : memref<8x8x128xf32, #tpu.memory_space<vmem>>, vector<1x8x128xf32>
    %309 = vector.shape_cast %308 : vector<1x8x128xf32> to vector<8x128xf32>
    %310 = arith.truncf %282 : vector<8x32xf32> to vector<8x32xbf16>
    %c0_95 = arith.constant 0 : index
    %c0_96 = arith.constant 0 : index
    %311 = vector.load %arg1[%c0_95, %c0_96] : memref<32x128xbf16, #tpu.memory_space<vmem>>, vector<32x128xbf16>
    %cst_97 = arith.constant dense<0.000000e+00> : vector<8x128xf32>
    %312 = tpu.matmul %310, %311, %cst_97 {dimension_numbers = #tpu.dot_dimension_numbers<[1], [0], [0], [1], [0, 0, 1, 1], [], []>} : vector<8x32xbf16>, vector<32x128xbf16>, vector<8x128xf32> -> vector<8x128xf32>
    %313 = arith.addf %309, %312 : vector<8x128xf32>
    %314 = vector.extract_strided_slice %313 {offsets = [0, 0], sizes = [8, 96], strides = [1, 1]} : vector<8x128xf32> to vector<8x96xf32>
    %315 = arith.negf %314 : vector<8x96xf32>
    %316 = math.exp %315 : vector<8x96xf32>
    %cst_98 = arith.constant 1.000000e+00 : f32
    %317 = vector.broadcast %cst_98 : f32 to vector<8x96xf32>
    %318 = arith.addf %317, %316 : vector<8x96xf32>
    %319 = arith.divf %317, %318 : vector<8x96xf32>
    %320 = vector.extract_strided_slice %313 {offsets = [0, 96], sizes = [8, 32], strides = [1, 1]} : vector<8x128xf32> to vector<8x32xf32>
    %321 = math.tanh %320 : vector<8x32xf32>
    %322 = vector.extract_strided_slice %319 {offsets = [0, 0], sizes = [8, 32], strides = [1, 1]} : vector<8x96xf32> to vector<8x32xf32>
    %323 = vector.extract_strided_slice %319 {offsets = [0, 32], sizes = [8, 32], strides = [1, 1]} : vector<8x96xf32> to vector<8x32xf32>
    %324 = vector.extract_strided_slice %319 {offsets = [0, 64], sizes = [8, 32], strides = [1, 1]} : vector<8x96xf32> to vector<8x32xf32>
    %325 = arith.mulf %323, %280 : vector<8x32xf32>
    %326 = arith.mulf %322, %321 : vector<8x32xf32>
    %327 = arith.addf %325, %326 : vector<8x32xf32>
    %328 = math.tanh %327 : vector<8x32xf32>
    %329 = arith.mulf %324, %328 : vector<8x32xf32>
    %330 = tpu.concatenate %282, %307 in 1 : vector<8x32xf32>, vector<8x32xf32> -> vector<8x64xf32>
    %331 = arith.truncf %330 : vector<8x64xf32> to vector<8x64xbf16>
    %c0_99 = arith.constant 0 : index
    %c0_100 = arith.constant 0 : index
    %c0_101 = arith.constant 0 : index
    %332 = vector.load %arg2[%c0_99, %c0_100, %c0_101] : memref<1x64x128xbf16, #tpu.memory_space<vmem>>, vector<1x64x128xbf16>
    %333 = vector.shape_cast %332 : vector<1x64x128xbf16> to vector<64x128xbf16>
    %cst_102 = arith.constant dense<0.000000e+00> : vector<8x128xf32>
    %334 = tpu.matmul %331, %333, %cst_102 {dimension_numbers = #tpu.dot_dimension_numbers<[1], [0], [0], [1], [0, 0, 1, 1], [], []>} : vector<8x64xbf16>, vector<64x128xbf16>, vector<8x128xf32> -> vector<8x128xf32>
    %c0_103 = arith.constant 0 : index
    %c0_104 = arith.constant 0 : index
    %c0_105 = arith.constant 0 : index
    %335 = vector.load %arg3[%c0_103, %c0_104, %c0_105] : memref<1x1x128xf32, #tpu.memory_space<vmem>>, vector<1x1x128xf32>
    %336 = vector.shape_cast %335 : vector<1x1x128xf32> to vector<1x128xf32>
    %337 = vector.broadcast %336 : vector<1x128xf32> to vector<8x128xf32>
    %338 = arith.addf %334, %337 : vector<8x128xf32>
    %339 = vector.extract_strided_slice %338 {offsets = [0, 0], sizes = [8, 96], strides = [1, 1]} : vector<8x128xf32> to vector<8x96xf32>
    %340 = arith.negf %339 : vector<8x96xf32>
    %341 = math.exp %340 : vector<8x96xf32>
    %cst_106 = arith.constant 1.000000e+00 : f32
    %342 = vector.broadcast %cst_106 : f32 to vector<8x96xf32>
    %343 = arith.addf %342, %341 : vector<8x96xf32>
    %344 = arith.divf %342, %343 : vector<8x96xf32>
    %345 = vector.extract_strided_slice %338 {offsets = [0, 96], sizes = [8, 32], strides = [1, 1]} : vector<8x128xf32> to vector<8x32xf32>
    %346 = math.tanh %345 : vector<8x32xf32>
    %347 = vector.extract_strided_slice %344 {offsets = [0, 0], sizes = [8, 32], strides = [1, 1]} : vector<8x96xf32> to vector<8x32xf32>
    %348 = vector.extract_strided_slice %344 {offsets = [0, 32], sizes = [8, 32], strides = [1, 1]} : vector<8x96xf32> to vector<8x32xf32>
    %349 = vector.extract_strided_slice %344 {offsets = [0, 64], sizes = [8, 32], strides = [1, 1]} : vector<8x96xf32> to vector<8x32xf32>
    %350 = arith.mulf %348, %305 : vector<8x32xf32>
    %351 = arith.mulf %347, %346 : vector<8x32xf32>
    %352 = arith.addf %350, %351 : vector<8x32xf32>
    %353 = math.tanh %352 : vector<8x32xf32>
    %354 = arith.mulf %349, %353 : vector<8x32xf32>
    %355 = tpu.concatenate %329, %354 in 1 : vector<8x32xf32>, vector<8x32xf32> -> vector<8x64xf32>
    %356 = arith.truncf %355 : vector<8x64xf32> to vector<8x64xbf16>
    %c0_107 = arith.constant 0 : index
    %c0_108 = arith.constant 0 : index
    %c0_109 = arith.constant 0 : index
    %357 = vector.load %arg2[%c0_107, %c0_108, %c0_109] : memref<1x64x128xbf16, #tpu.memory_space<vmem>>, vector<1x64x128xbf16>
    %358 = vector.shape_cast %357 : vector<1x64x128xbf16> to vector<64x128xbf16>
    %cst_110 = arith.constant dense<0.000000e+00> : vector<8x128xf32>
    %359 = tpu.matmul %356, %358, %cst_110 {dimension_numbers = #tpu.dot_dimension_numbers<[1], [0], [0], [1], [0, 0, 1, 1], [], []>} : vector<8x64xbf16>, vector<64x128xbf16>, vector<8x128xf32> -> vector<8x128xf32>
    %c0_111 = arith.constant 0 : index
    %c0_112 = arith.constant 0 : index
    %c0_113 = arith.constant 0 : index
    %360 = vector.load %arg3[%c0_111, %c0_112, %c0_113] : memref<1x1x128xf32, #tpu.memory_space<vmem>>, vector<1x1x128xf32>
    %361 = vector.shape_cast %360 : vector<1x1x128xf32> to vector<1x128xf32>
    %362 = vector.broadcast %361 : vector<1x128xf32> to vector<8x128xf32>
    %363 = arith.addf %359, %362 : vector<8x128xf32>
    %364 = vector.extract_strided_slice %363 {offsets = [0, 0], sizes = [8, 96], strides = [1, 1]} : vector<8x128xf32> to vector<8x96xf32>
    %365 = arith.negf %364 : vector<8x96xf32>
    %366 = math.exp %365 : vector<8x96xf32>
    %cst_114 = arith.constant 1.000000e+00 : f32
    %367 = vector.broadcast %cst_114 : f32 to vector<8x96xf32>
    %368 = arith.addf %367, %366 : vector<8x96xf32>
    %369 = arith.divf %367, %368 : vector<8x96xf32>
    %370 = vector.extract_strided_slice %363 {offsets = [0, 96], sizes = [8, 32], strides = [1, 1]} : vector<8x128xf32> to vector<8x32xf32>
    %371 = math.tanh %370 : vector<8x32xf32>
    %372 = vector.extract_strided_slice %369 {offsets = [0, 0], sizes = [8, 32], strides = [1, 1]} : vector<8x96xf32> to vector<8x32xf32>
    %373 = vector.extract_strided_slice %369 {offsets = [0, 32], sizes = [8, 32], strides = [1, 1]} : vector<8x96xf32> to vector<8x32xf32>
    %374 = vector.extract_strided_slice %369 {offsets = [0, 64], sizes = [8, 32], strides = [1, 1]} : vector<8x96xf32> to vector<8x32xf32>
    %375 = arith.mulf %373, %352 : vector<8x32xf32>
    %376 = arith.mulf %372, %371 : vector<8x32xf32>
    %377 = arith.addf %375, %376 : vector<8x32xf32>
    %378 = math.tanh %377 : vector<8x32xf32>
    %379 = arith.mulf %374, %378 : vector<8x32xf32>
    %380 = arith.truncf %379 : vector<8x32xf32> to vector<8x32xbf16>
    %c0_115 = arith.constant 0 : index
    %c0_116 = arith.constant 0 : index
    %381 = vector.load %arg4[%c0_115, %c0_116] : memref<32x96xbf16, #tpu.memory_space<vmem>>, vector<32x96xbf16>
    %cst_117 = arith.constant dense<0.000000e+00> : vector<8x96xf32>
    %382 = tpu.matmul %380, %381, %cst_117 {dimension_numbers = #tpu.dot_dimension_numbers<[1], [0], [0], [1], [0, 0, 1, 1], [], []>} : vector<8x32xbf16>, vector<32x96xbf16>, vector<8x96xf32> -> vector<8x96xf32>
    %c0_118 = arith.constant 0 : index
    %c0_119 = arith.constant 0 : index
    %383 = vector.load %arg5[%c0_118, %c0_119] : memref<1x96xf32, #tpu.memory_space<vmem>>, vector<1x96xf32>
    %384 = vector.broadcast %383 : vector<1x96xf32> to vector<8x96xf32>
    %385 = arith.addf %382, %384 : vector<8x96xf32>
    %cst_120 = arith.constant 0.000000e+00 : f32
    %386 = vector.broadcast %cst_120 : f32 to vector<8x96xf32>
    %387 = arith.maximumf %385, %386 : vector<8x96xf32>
    %388 = vector.extract_strided_slice %387 {offsets = [0, 0], sizes = [8, 64], strides = [1, 1]} : vector<8x96xf32> to vector<8x64xf32>
    %389 = vector.extract_strided_slice %387 {offsets = [0, 64], sizes = [8, 32], strides = [1, 1]} : vector<8x96xf32> to vector<8x32xf32>
    %390 = arith.truncf %388 : vector<8x64xf32> to vector<8x64xbf16>
    %c0_121 = arith.constant 0 : index
    %c0_122 = arith.constant 0 : index
    %391 = vector.load %arg6[%c0_121, %c0_122] : memref<64x32xbf16, #tpu.memory_space<vmem>>, vector<64x32xbf16>
    %cst_123 = arith.constant dense<0.000000e+00> : vector<8x32xf32>
    %392 = tpu.matmul %390, %391, %cst_123 {dimension_numbers = #tpu.dot_dimension_numbers<[1], [0], [0], [1], [0, 0, 1, 1], [], []>} : vector<8x64xbf16>, vector<64x32xbf16>, vector<8x32xf32> -> vector<8x32xf32>
    %c0_124 = arith.constant 0 : index
    %c0_125 = arith.constant 0 : index
    %393 = vector.load %arg7[%c0_124, %c0_125] : memref<1x32xf32, #tpu.memory_space<vmem>>, vector<1x32xf32>
    %394 = vector.broadcast %393 : vector<1x32xf32> to vector<8x32xf32>
    %395 = arith.addf %392, %394 : vector<8x32xf32>
    %cst_126 = arith.constant 0.000000e+00 : f32
    %396 = vector.broadcast %cst_126 : f32 to vector<8x32xf32>
    %397 = arith.maximumf %395, %396 : vector<8x32xf32>
    %398 = tpu.concatenate %397, %389 in 1 : vector<8x32xf32>, vector<8x32xf32> -> vector<8x64xf32>
    %399 = arith.truncf %398 : vector<8x64xf32> to vector<8x64xbf16>
    %c0_127 = arith.constant 0 : index
    %c0_128 = arith.constant 0 : index
    %400 = vector.load %arg8[%c0_127, %c0_128] : memref<64x128xbf16, #tpu.memory_space<vmem>>, vector<64x128xbf16>
    %cst_129 = arith.constant dense<0.000000e+00> : vector<8x128xf32>
    %401 = tpu.matmul %399, %400, %cst_129 {dimension_numbers = #tpu.dot_dimension_numbers<[1], [0], [0], [1], [0, 0, 1, 1], [], []>} : vector<8x64xbf16>, vector<64x128xbf16>, vector<8x128xf32> -> vector<8x128xf32>
    %c0_130 = arith.constant 0 : index
    %c0_131 = arith.constant 0 : index
    %402 = vector.load %arg9[%c0_130, %c0_131] : memref<1x128xf32, #tpu.memory_space<vmem>>, vector<1x128xf32>
    %403 = vector.broadcast %402 : vector<1x128xf32> to vector<8x128xf32>
    %404 = arith.addf %401, %403 : vector<8x128xf32>
    %405 = tpu.iota {dimensions = array<i32: 1>} : vector<8x128xi32>
    %c8_i32 = arith.constant 8 : i32
    %406 = vector.broadcast %c8_i32 : i32 to vector<8x128xi32>
    %407 = arith.cmpi eq, %405, %406 : vector<8x128xi32>
    %408 = arith.negf %404 : vector<8x128xf32>
    %409 = math.exp %408 : vector<8x128xf32>
    %cst_132 = arith.constant 1.000000e+00 : f32
    %410 = vector.broadcast %cst_132 : f32 to vector<8x128xf32>
    %411 = arith.addf %410, %409 : vector<8x128xf32>
    %412 = arith.divf %410, %411 : vector<8x128xf32>
    %413 = arith.select %407, %412, %404 : vector<8x128xi1>, vector<8x128xf32>
    %c0_133 = arith.constant 0 : index
    %c0_134 = arith.constant 0 : index
    %414 = vector.load %arg10[%c0_133, %c0_134] : memref<8x128xf32, #tpu.memory_space<vmem>>, vector<8x128xf32>
    tpu.vector_store %arg10[%c0_133, %c0_134], %413 {strides = array<i32>} : memref<8x128xf32, #tpu.memory_space<vmem>>, vector<8x128xf32>,
    return
  }
}

</mosaic_0001>

<llo_original>
// kernel: forward.1
$region0: #{forward.1}
  #allocation0 [shape = 'u32[]', space=smem, size = 0x4, offset = 0x4, fixed_abs, tag = 'smem constant byte address 0x4 - core index']
  #allocation1 [shape = 'u32[144,128]{1,0:T(1,128)}', space=vmem, size = 0x12000, scoped, tag = 'internal scratch']
  %s0 = inlined_call_operand.vmem [shape: f32[8,8,128], index: 0, kind: input, shape index: {}]
  %s1 = inlined_call_operand.vmem [shape: bf16[32,128], index: 1, kind: input, shape index: {}]
  %s2 = inlined_call_operand.vmem [shape: bf16[1,64,128], index: 2, kind: input, shape index: {}]
  %s3 = inlined_call_operand.vmem [shape: f32[1,1,128], index: 3, kind: input, shape index: {}]
  %s4 = inlined_call_operand.vmem [shape: bf16[32,96], index: 4, kind: input, shape index: {}]
  %s5 = inlined_call_operand.vmem [shape: f32[1,96], index: 5, kind: input, shape index: {}]
  %s6 = inlined_call_operand.vmem [shape: bf16[64,32], index: 6, kind: input, shape index: {}]
  %s7 = inlined_call_operand.vmem [shape: f32[1,32], index: 7, kind: input, shape index: {}]
  %s8 = inlined_call_operand.vmem [shape: bf16[64,128], index: 8, kind: input, shape index: {}]
  %s9 = inlined_call_operand.vmem [shape: f32[1,128], index: 9, kind: input, shape index: {}]
  %s10 = inlined_call_operand.vmem [shape: f32[8,128], index: 10, kind: output, shape index: {}]
  %s11 = sld [smem:[#allocation0]]
  $region50: #{forward.1} parent=0
    _
  %s13 = ssub.s32 1, %s11
  %s14 = scalar_select 0, %s13, %s11
  // Predicated region
  $region2: #{forward.1} parent=0 // pred_check
    _
  $region3: #{forward.1} parent=0 // pred_check_branch
    %16 = sbr.rel (0) target = $region5
  $region4: #{forward.1} parent=0 // pred_region
    _
  $region5: #{forward.1} parent=0 // pred_fallthru
    _
  // Predicated region
  $region6: #{forward.1} parent=0 // pred_check
    _
  $region7: #{forward.1} parent=0 // pred_check_branch
    %18 = sbr.rel (0) target = $region9
  $region8: #{forward.1} parent=0 // pred_region
    _
  $region9: #{forward.1} parent=0 // pred_fallthru
    _
  // Predicated region
  $region10: #{forward.1} parent=0 // pred_check
    _
  $region11: #{forward.1} parent=0 // pred_check_branch
    %20 = sbr.rel (0) target = $region13
  $region12: #{forward.1} parent=0 // pred_region
    _
  $region13: #{forward.1} parent=0 // pred_fallthru
    _
  // Predicated region
  $region14: #{forward.1} parent=0 // pred_check
    _
  $region15: #{forward.1} parent=0 // pred_check_branch
    %22 = sbr.rel (0) target = $region17
  $region16: #{forward.1} parent=0 // pred_region
    _
  $region17: #{forward.1} parent=0 // pred_fallthru
    _
  // Predicated region
  $region18: #{forward.1} parent=0 // pred_check
    _
  $region19: #{forward.1} parent=0 // pred_check_branch
    %24 = sbr.rel (0) target = $region21
  $region20: #{forward.1} parent=0 // pred_region
    _
  $region21: #{forward.1} parent=0 // pred_fallthru
    _
  // Predicated region
  $region22: #{forward.1} parent=0 // pred_check
    _
  $region23: #{forward.1} parent=0 // pred_check_branch
    %26 = sbr.rel (0) target = $region25
  $region24: #{forward.1} parent=0 // pred_region
    _
  $region25: #{forward.1} parent=0 // pred_fallthru
    _
  // Predicated region
  $region26: #{forward.1} parent=0 // pred_check
    _
  $region27: #{forward.1} parent=0 // pred_check_branch
    %28 = sbr.rel (0) target = $region29
  $region28: #{forward.1} parent=0 // pred_region
    _
  $region29: #{forward.1} parent=0 // pred_fallthru
    _
  // Predicated region
  $region30: #{forward.1} parent=0 // pred_check
    _
  $region31: #{forward.1} parent=0 // pred_check_branch
    %30 = sbr.rel (0) target = $region33
  $region32: #{forward.1} parent=0 // pred_region
    _
  $region33: #{forward.1} parent=0 // pred_fallthru
    _
  // Predicated region
  $region34: #{forward.1} parent=0 // pred_check
    _
  $region35: #{forward.1} parent=0 // pred_check_branch
    %32 = sbr.rel (0) target = $region37
  $region36: #{forward.1} parent=0 // pred_region
    _
  $region37: #{forward.1} parent=0 // pred_fallthru
    _
  // Predicated region
  $region38: #{forward.1} parent=0 // pred_check
    _
  $region39: #{forward.1} parent=0 // pred_check_branch
    %34 = sbr.rel (0) target = $region41
  $region40: #{forward.1} parent=0 // pred_region
    _
  $region41: #{forward.1} parent=0 // pred_fallthru
    _
  %v36 = vld [vmem:[%s0] sm:$0xff]
  %v37 = vld [vmem:[%s1] sm:$0xf]
  %v38 = vld [vmem:[%s1 + $0x4] sm:$0xf]
  %v39 = vld [vmem:[%s1 + $0x8] sm:$0xf]
  %v40 = vld [vmem:[%s1 + $0xc] sm:$0xf]
  %v45 = vunpack.c.l.b16 %v37
  %v46 = vunpack.c.l.b16 %v38
  %v47 = vunpack.c.l.b16 %v39
  %v48 = vunpack.c.l.b16 %v40
  %v49 = vpack.c.b16 %v46, %v45
  %v50 = vpack.c.b16 %v48, %v47
  %vm53 = vcmask 261120
  %v55 = vsel %vm53, 0, 0
  %57 = vmatprep.subr.bf16.mxu0 0
  %58 = vmatpush1.bf16.msra.mxu0 %v49
  %59 = vmatprep.subr.bf16.mxu0 0
  %60 = vmatpush1.bf16.msra.mxu0 %v50
  %61 = vmatprep.subr.bf16.mxu0 0
  %62 = vmatpush1.bf16.msra.mxu0 0
  %63 = vmatprep.subr.bf16.mxu0 0
  %64 = vmatpush1.bf16.msra.mxu0 0
  %65 = vmatprep.subr.bf16.mxu0 0
  %66 = vmatpush1.bf16.msra.mxu0 0
  %67 = vmatprep.subr.bf16.mxu0 0
  %68 = vmatpush1.bf16.msra.mxu0 0
  %69 = vmatprep.subr.bf16.mxu0 0
  %70 = vmatpush1.bf16.msra.mxu0 0
  %71 = vmatprep.subr.bf16.mxu0 0
  %72 = vmatpush1.bf16.msra.mxu0 0
  %73 = vmatprep.subr.bf16.mxu0 0
  %74 = vmatpush1.bf16.msra.mxu0 0
  %75 = vmatprep.subr.bf16.mxu0 0
  %76 = vmatpush1.bf16.msra.mxu0 0
  %77 = vmatprep.subr.bf16.mxu0 0
  %78 = vmatpush1.bf16.msra.mxu0 0
  %79 = vmatprep.subr.bf16.mxu0 0
  %80 = vmatpush1.bf16.msra.mxu0 0
  %81 = vmatprep.subr.bf16.mxu0 0
  %82 = vmatpush1.bf16.msra.mxu0 0
  %83 = vmatprep.subr.bf16.mxu0 0
  %84 = vmatpush1.bf16.msra.mxu0 0
  %85 = vmatprep.subr.bf16.mxu0 0
  %86 = vmatpush1.bf16.msra.mxu0 0
  %87 = vmatprep.subr.bf16.mxu0 0
  %88 = vmatpush1.bf16.msra.mxu0 0
  %89 = vmatprep.mubr.bf16.mxu0 0
  %90 = vmatmul.mubr.bf16.gmra.mrb[0].mxu0 %v55
  %v91 = vpop.f32.mrb[0].mxu0
  %v92 = vadd.f32 0.0, %v91
  %v93 = vpop.f32.mrb[0].mxu0
  %v94 = vpop.f32.mrb[0].mxu0
  %v95 = vpop.f32.mrb[0].mxu0
  %96 = vdwg.mxu0
  %v97 = vadd.f32 %v36, %v92
  %v98 = vxor.u32 %v97, 2147483648
  %v99 = vmul.f32 %v98, 1.442695
  %v100 = vpow.pop %v99
  %v101 = vadd.f32 %v100, 1.0
  %v102 = vrcp.pop %v101
  %v103 = vmul.f32 1.0, %v102
  %v104 = vtanh.pop %v97
  %v105 = vmul.f32 %v103, 0.0
  %107 = vrot.lane.b32.xlu0 %v104, 32
  %v108 = vpop.permute.xlu0 %107
  %v110 = vmul.f32 %v103, %v108
  %112 = vrot.lane.b32.xlu0 %v110, 32
  %v113 = vpop.permute.xlu0 %112
  %v115 = vadd.f32 %v105, %v113
  %v116 = vtanh.pop %v115
  %118 = vrot.lane.b32.xlu0 %v116, 32
  %v119 = vpop.permute.xlu0 %118
  %v121 = vmul.f32 %v103, %v119
  %s122 = scalar_lea.vmem %s0, 8
  %v123 = vld [vmem:[%s122] sm:$0xff]
  %v124 = vpack.c.bf16 %v121, %v121
  %126 = vrot.lane.b32.xlu0 %v124, 64
  %v127 = vpop.permute.xlu0 %126
  %v129 = vsel %vm53, %v127, 0
  %131 = vmatprep.subr.bf16.mxu0 0
  %132 = vmatpush1.bf16.msra.mxu0 %v49
  %133 = vmatprep.subr.bf16.mxu0 0
  %134 = vmatpush1.bf16.msra.mxu0 %v50
  %135 = vmatprep.subr.bf16.mxu0 0
  %136 = vmatpush1.bf16.msra.mxu0 0
  %137 = vmatprep.subr.bf16.mxu0 0
  %138 = vmatpush1.bf16.msra.mxu0 0
  %139 = vmatprep.subr.bf16.mxu0 0
  %140 = vmatpush1.bf16.msra.mxu0 0
  %141 = vmatprep.subr.bf16.mxu0 0
  %142 = vmatpush1.bf16.msra.mxu0 0
  %143 = vmatprep.subr.bf16.mxu0 0
  %144 = vmatpush1.bf16.msra.mxu0 0
  %145 = vmatprep.subr.bf16.mxu0 0
  %146 = vmatpush1.bf16.msra.mxu0 0
  %147 = vmatprep.subr.bf16.mxu0 0
  %148 = vmatpush1.bf16.msra.mxu0 0
  %149 = vmatprep.subr.bf16.mxu0 0
  %150 = vmatpush1.bf16.msra.mxu0 0
  %151 = vmatprep.subr.bf16.mxu0 0
  %152 = vmatpush1.bf16.msra.mxu0 0
  %153 = vmatprep.subr.bf16.mxu0 0
  %154 = vmatpush1.bf16.msra.mxu0 0
  %155 = vmatprep.subr.bf16.mxu0 0
  %156 = vmatpush1.bf16.msra.mxu0 0
  %157 = vmatprep.subr.bf16.mxu0 0
  %158 = vmatpush1.bf16.msra.mxu0 0
  %159 = vmatprep.subr.bf16.mxu0 0
  %160 = vmatpush1.bf16.msra.mxu0 0
  %161 = vmatprep.subr.bf16.mxu0 0
  %162 = vmatpush1.bf16.msra.mxu0 0
  %163 = vmatprep.mubr.bf16.mxu0 0
  %164 = vmatmul.mubr.bf16.gmra.mrb[0].mxu0 %v129
  %v165 = vpop.f32.mrb[0].mxu0
  %v166 = vadd.f32 0.0, %v165
  %v167 = vpop.f32.mrb[0].mxu0
  %v168 = vpop.f32.mrb[0].mxu0
  %v169 = vpop.f32.mrb[0].mxu0
  %170 = vdwg.mxu0
  %v171 = vadd.f32 %v123, %v166
  %v172 = vxor.u32 %v171, 2147483648
  %v173 = vmul.f32 %v172, 1.442695
  %v174 = vpow.pop %v173
  %v175 = vadd.f32 %v174, 1.0
  %v176 = vrcp.pop %v175
  %v177 = vmul.f32 1.0, %v176
  %v178 = vtanh.pop %v171
  %v179 = vmul.f32 %v177, %v115
  %181 = vrot.lane.b32.xlu0 %v178, 32
  %v182 = vpop.permute.xlu0 %181
  %v184 = vmul.f32 %v177, %v182
  %186 = vrot.lane.b32.xlu0 %v184, 32
  %v187 = vpop.permute.xlu0 %186
  %v189 = vadd.f32 %v179, %v187
  %v190 = vtanh.pop %v189
  %192 = vrot.lane.b32.xlu0 %v190, 32
  %v193 = vpop.permute.xlu0 %192
  %v195 = vmul.f32 %v177, %v193
  %197 = vrot.lane.b32.xlu0 %v121, 64
  %v198 = vpop.permute.xlu0 %197
  %v200 = vsel %vm53, %v198, 0.0
  %v201 = vpack.c.bf16 %v200, %v200
  %v202 = vld [vmem:[%s2] sm:$0xf]
  %v203 = vld [vmem:[%s2 + $0x4] sm:$0xf]
  %v204 = vld [vmem:[%s2 + $0x8] sm:$0xf]
  %v205 = vld [vmem:[%s2 + $0xc] sm:$0xf]
  %v206 = vld [vmem:[%s2 + $0x10] sm:$0xf]
  %v207 = vld [vmem:[%s2 + $0x14] sm:$0xf]
  %v208 = vld [vmem:[%s2 + $0x18] sm:$0xf]
  %v209 = vld [vmem:[%s2 + $0x1c] sm:$0xf]
  %v210 = vld [vmem:[%s3] sm:$0x1]
  %v212 = vlaneseq
  %v213 = vshrl.u32 %v212, 7
  %v214 = vsub.s32 0, %v213
  %v215 = vrot.slane %v210, %v214
  %v225 = vunpack.c.l.b16 %v202
  %v226 = vunpack.c.l.b16 %v203
  %v227 = vunpack.c.l.b16 %v204
  %v228 = vunpack.c.l.b16 %v205
  %v229 = vunpack.c.l.b16 %v206
  %v230 = vunpack.c.l.b16 %v207
  %v231 = vunpack.c.l.b16 %v208
  %v232 = vunpack.c.l.b16 %v209
  %v233 = vpack.c.b16 %v226, %v225
  %v234 = vpack.c.b16 %v228, %v227
  %v235 = vpack.c.b16 %v230, %v229
  %v236 = vpack.c.b16 %v232, %v231
  %vm241 = vcmask 523264
  %v243 = vsel %vm241, %v201, 0
  %245 = vmatprep.subr.bf16.mxu0 0
  %246 = vmatpush1.bf16.msra.mxu0 %v233
  %247 = vmatprep.subr.bf16.mxu0 0
  %248 = vmatpush1.bf16.msra.mxu0 %v234
  %249 = vmatprep.subr.bf16.mxu0 0
  %250 = vmatpush1.bf16.msra.mxu0 %v235
  %251 = vmatprep.subr.bf16.mxu0 0
  %252 = vmatpush1.bf16.msra.mxu0 %v236
  %253 = vmatprep.subr.bf16.mxu0 0
  %254 = vmatpush1.bf16.msra.mxu0 0
  %255 = vmatprep.subr.bf16.mxu0 0
  %256 = vmatpush1.bf16.msra.mxu0 0
  %257 = vmatprep.subr.bf16.mxu0 0
  %258 = vmatpush1.bf16.msra.mxu0 0
  %259 = vmatprep.subr.bf16.mxu0 0
  %260 = vmatpush1.bf16.msra.mxu0 0
  %261 = vmatprep.subr.bf16.mxu0 0
  %262 = vmatpush1.bf16.msra.mxu0 0
  %263 = vmatprep.subr.bf16.mxu0 0
  %264 = vmatpush1.bf16.msra.mxu0 0
  %265 = vmatprep.subr.bf16.mxu0 0
  %266 = vmatpush1.bf16.msra.mxu0 0
  %267 = vmatprep.subr.bf16.mxu0 0
  %268 = vmatpush1.bf16.msra.mxu0 0
  %269 = vmatprep.subr.bf16.mxu0 0
  %270 = vmatpush1.bf16.msra.mxu0 0
  %271 = vmatprep.subr.bf16.mxu0 0
  %272 = vmatpush1.bf16.msra.mxu0 0
  %273 = vmatprep.subr.bf16.mxu0 0
  %274 = vmatpush1.bf16.msra.mxu0 0
  %275 = vmatprep.subr.bf16.mxu0 0
  %276 = vmatpush1.bf16.msra.mxu0 0
  %277 = vmatprep.mubr.bf16.mxu0 0
  %278 = vmatmul.mubr.bf16.gmra.mrb[0].mxu0 %v243
  %v279 = vpop.f32.mrb[0].mxu0
  %v280 = vadd.f32 %v215, %v279
  %v281 = vpop.f32.mrb[0].mxu0
  %v282 = vpop.f32.mrb[0].mxu0
  %v283 = vpop.f32.mrb[0].mxu0
  %284 = vdwg.mxu0
  %v285 = vxor.u32 %v280, 2147483648
  %v286 = vmul.f32 %v285, 1.442695
  %v287 = vpow.pop %v286
  %v288 = vadd.f32 %v287, 1.0
  %v289 = vrcp.pop %v288
  %v290 = vmul.f32 1.0, %v289
  %v291 = vtanh.pop %v280
  %v292 = vmul.f32 %v290, 0.0
  %294 = vrot.lane.b32.xlu0 %v291, 32
  %v295 = vpop.permute.xlu0 %294
  %v297 = vmul.f32 %v290, %v295
  %299 = vrot.lane.b32.xlu0 %v297, 32
  %v300 = vpop.permute.xlu0 %299
  %v302 = vadd.f32 %v292, %v300
  %v303 = vtanh.pop %v302
  %305 = vrot.lane.b32.xlu0 %v303, 32
  %v306 = vpop.permute.xlu0 %305
  %v308 = vmul.f32 %v290, %v306
  %s309 = scalar_lea.vmem %s0, 16
  %v310 = vld [vmem:[%s309] sm:$0xff]
  %v311 = vpack.c.bf16 %v195, %v195
  %313 = vrot.lane.b32.xlu0 %v311, 64
  %v314 = vpop.permute.xlu0 %313
  %v316 = vsel %vm53, %v314, 0
  %318 = vmatprep.subr.bf16.mxu0 0
  %319 = vmatpush1.bf16.msra.mxu0 %v49
  %320 = vmatprep.subr.bf16.mxu0 0
  %321 = vmatpush1.bf16.msra.mxu0 %v50
  %322 = vmatprep.subr.bf16.mxu0 0
  %323 = vmatpush1.bf16.msra.mxu0 0
  %324 = vmatprep.subr.bf16.mxu0 0
  %325 = vmatpush1.bf16.msra.mxu0 0
  %326 = vmatprep.subr.bf16.mxu0 0
  %327 = vmatpush1.bf16.msra.mxu0 0
  %328 = vmatprep.subr.bf16.mxu0 0
  %329 = vmatpush1.bf16.msra.mxu0 0
  %330 = vmatprep.subr.bf16.mxu0 0
  %331 = vmatpush1.bf16.msra.mxu0 0
  %332 = vmatprep.subr.bf16.mxu0 0
  %333 = vmatpush1.bf16.msra.mxu0 0
  %334 = vmatprep.subr.bf16.mxu0 0
  %335 = vmatpush1.bf16.msra.mxu0 0
  %336 = vmatprep.subr.bf16.mxu0 0
  %337 = vmatpush1.bf16.msra.mxu0 0
  %338 = vmatprep.subr.bf16.mxu0 0
  %339 = vmatpush1.bf16.msra.mxu0 0
  %340 = vmatprep.subr.bf16.mxu0 0
  %341 = vmatpush1.bf16.msra.mxu0 0
  %342 = vmatprep.subr.bf16.mxu0 0
  %343 = vmatpush1.bf16.msra.mxu0 0
  %344 = vmatprep.subr.bf16.mxu0 0
  %345 = vmatpush1.bf16.msra.mxu0 0
  %346 = vmatprep.subr.bf16.mxu0 0
  %347 = vmatpush1.bf16.msra.mxu0 0
  %348 = vmatprep.subr.bf16.mxu0 0
  %349 = vmatpush1.bf16.msra.mxu0 0
  %350 = vmatprep.mubr.bf16.mxu0 0
  %351 = vmatmul.mubr.bf16.gmra.mrb[0].mxu0 %v316
  %v352 = vpop.f32.mrb[0].mxu0
  %v353 = vadd.f32 0.0, %v352
  %v354 = vpop.f32.mrb[0].mxu0
  %v355 = vpop.f32.mrb[0].mxu0
  %v356 = vpop.f32.mrb[0].mxu0
  %357 = vdwg.mxu0
  %v358 = vadd.f32 %v310, %v353
  %v359 = vxor.u32 %v358, 2147483648
  %v360 = vmul.f32 %v359, 1.442695
  %v361 = vpow.pop %v360
  %v362 = vadd.f32 %v361, 1.0
  %v363 = vrcp.pop %v362
  %v364 = vmul.f32 1.0, %v363
  %v365 = vtanh.pop %v358
  %v366 = vmul.f32 %v364, %v189
  %368 = vrot.lane.b32.xlu0 %v365, 32
  %v369 = vpop.permute.xlu0 %368
  %v371 = vmul.f32 %v364, %v369
  %373 = vrot.lane.b32.xlu0 %v371, 32
  %v374 = vpop.permute.xlu0 %373
  %v376 = vadd.f32 %v366, %v374
  %v377 = vtanh.pop %v376
  %379 = vrot.lane.b32.xlu0 %v377, 32
  %v380 = vpop.permute.xlu0 %379
  %v382 = vmul.f32 %v364, %v380
  %384 = vrot.lane.b32.xlu0 %v195, 64
  %v385 = vpop.permute.xlu0 %384
  %388 = vrot.lane.b32.xlu0 %v308, 96
  %v389 = vpop.permute.xlu0 %388
  %v391 = vsel %vm53, %v385, %v389
  %v392 = vpack.c.bf16 %v391, %v391
  %v394 = vsel %vm241, %v392, 0
  %396 = vmatprep.subr.bf16.mxu0 0
  %397 = vmatpush1.bf16.msra.mxu0 %v233
  %398 = vmatprep.subr.bf16.mxu0 0
  %399 = vmatpush1.bf16.msra.mxu0 %v234
  %400 = vmatprep.subr.bf16.mxu0 0
  %401 = vmatpush1.bf16.msra.mxu0 %v235
  %402 = vmatprep.subr.bf16.mxu0 0
  %403 = vmatpush1.bf16.msra.mxu0 %v236
  %404 = vmatprep.subr.bf16.mxu0 0
  %405 = vmatpush1.bf16.msra.mxu0 0
  %406 = vmatprep.subr.bf16.mxu0 0
  %407 = vmatpush1.bf16.msra.mxu0 0
  %408 = vmatprep.subr.bf16.mxu0 0
  %409 = vmatpush1.bf16.msra.mxu0 0
  %410 = vmatprep.subr.bf16.mxu0 0
  %411 = vmatpush1.bf16.msra.mxu0 0
  %412 = vmatprep.subr.bf16.mxu0 0
  %413 = vmatpush1.bf16.msra.mxu0 0
  %414 = vmatprep.subr.bf16.mxu0 0
  %415 = vmatpush1.bf16.msra.mxu0 0
  %416 = vmatprep.subr.bf16.mxu0 0
  %417 = vmatpush1.bf16.msra.mxu0 0
  %418 = vmatprep.subr.bf16.mxu0 0
  %419 = vmatpush1.bf16.msra.mxu0 0
  %420 = vmatprep.subr.bf16.mxu0 0
  %421 = vmatpush1.bf16.msra.mxu0 0
  %422 = vmatprep.subr.bf16.mxu0 0
  %423 = vmatpush1.bf16.msra.mxu0 0
  %424 = vmatprep.subr.bf16.mxu0 0
  %425 = vmatpush1.bf16.msra.mxu0 0
  %426 = vmatprep.subr.bf16.mxu0 0
  %427 = vmatpush1.bf16.msra.mxu0 0
  %428 = vmatprep.mubr.bf16.mxu0 0
  %429 = vmatmul.mubr.bf16.gmra.mrb[0].mxu0 %v394
  %v430 = vpop.f32.mrb[0].mxu0
  %v431 = vadd.f32 %v215, %v430
  %v432 = vpop.f32.mrb[0].mxu0
  %v433 = vpop.f32.mrb[0].mxu0
  %v434 = vpop.f32.mrb[0].mxu0
  %435 = vdwg.mxu0
  %v436 = vxor.u32 %v431, 2147483648
  %v437 = vmul.f32 %v436, 1.442695
  %v438 = vpow.pop %v437
  %v439 = vadd.f32 %v438, 1.0
  %v440 = vrcp.pop %v439
  %v441 = vmul.f32 1.0, %v440
  %v442 = vtanh.pop %v431
  %v443 = vmul.f32 %v441, %v302
  %445 = vrot.lane.b32.xlu0 %v442, 32
  %v446 = vpop.permute.xlu0 %445
  %v448 = vmul.f32 %v441, %v446
  %450 = vrot.lane.b32.xlu0 %v448, 32
  %v451 = vpop.permute.xlu0 %450
  %v453 = vadd.f32 %v443, %v451
  %v454 = vtanh.pop %v453
  %456 = vrot.lane.b32.xlu0 %v454, 32
  %v457 = vpop.permute.xlu0 %456
  %v459 = vmul.f32 %v441, %v457
  %s460 = scalar_lea.vmem %s0, 24
  %v461 = vld [vmem:[%s460] sm:$0xff]
  %v462 = vpack.c.bf16 %v382, %v382
  %464 = vrot.lane.b32.xlu0 %v462, 64
  %v465 = vpop.permute.xlu0 %464
  %v467 = vsel %vm53, %v465, 0
  %469 = vmatprep.subr.bf16.mxu0 0
  %470 = vmatpush1.bf16.msra.mxu0 %v49
  %471 = vmatprep.subr.bf16.mxu0 0
  %472 = vmatpush1.bf16.msra.mxu0 %v50
  %473 = vmatprep.subr.bf16.mxu0 0
  %474 = vmatpush1.bf16.msra.mxu0 0
  %475 = vmatprep.subr.bf16.mxu0 0
  %476 = vmatpush1.bf16.msra.mxu0 0
  %477 = vmatprep.subr.bf16.mxu0 0
  %478 = vmatpush1.bf16.msra.mxu0 0
  %479 = vmatprep.subr.bf16.mxu0 0
  %480 = vmatpush1.bf16.msra.mxu0 0
  %481 = vmatprep.subr.bf16.mxu0 0
  %482 = vmatpush1.bf16.msra.mxu0 0
  %483 = vmatprep.subr.bf16.mxu0 0
  %484 = vmatpush1.bf16.msra.mxu0 0
  %485 = vmatprep.subr.bf16.mxu0 0
  %486 = vmatpush1.bf16.msra.mxu0 0
  %487 = vmatprep.subr.bf16.mxu0 0
  %488 = vmatpush1.bf16.msra.mxu0 0
  %489 = vmatprep.subr.bf16.mxu0 0
  %490 = vmatpush1.bf16.msra.mxu0 0
  %491 = vmatprep.subr.bf16.mxu0 0
  %492 = vmatpush1.bf16.msra.mxu0 0
  %493 = vmatprep.subr.bf16.mxu0 0
  %494 = vmatpush1.bf16.msra.mxu0 0
  %495 = vmatprep.subr.bf16.mxu0 0
  %496 = vmatpush1.bf16.msra.mxu0 0
  %497 = vmatprep.subr.bf16.mxu0 0
  %498 = vmatpush1.bf16.msra.mxu0 0
  %499 = vmatprep.subr.bf16.mxu0 0
  %500 = vmatpush1.bf16.msra.mxu0 0
  %501 = vmatprep.mubr.bf16.mxu0 0
  %502 = vmatmul.mubr.bf16.gmra.mrb[0].mxu0 %v467
  %v503 = vpop.f32.mrb[0].mxu0
  %v504 = vadd.f32 0.0, %v503
  %v505 = vpop.f32.mrb[0].mxu0
  %v506 = vpop.f32.mrb[0].mxu0
  %v507 = vpop.f32.mrb[0].mxu0
  %508 = vdwg.mxu0
  %v509 = vadd.f32 %v461, %v504
  %v510 = vxor.u32 %v509, 2147483648
  %v511 = vmul.f32 %v510, 1.442695
  %v512 = vpow.pop %v511
  %v513 = vadd.f32 %v512, 1.0
  %v514 = vrcp.pop %v513
  %v515 = vmul.f32 1.0, %v514
  %v516 = vtanh.pop %v509
  %v517 = vmul.f32 %v515, %v376
  %519 = vrot.lane.b32.xlu0 %v516, 32
  %v520 = vpop.permute.xlu0 %519
  %v522 = vmul.f32 %v515, %v520
  %524 = vrot.lane.b32.xlu0 %v522, 32
  %v525 = vpop.permute.xlu0 %524
  %v527 = vadd.f32 %v517, %v525
  %v528 = vtanh.pop %v527
  %530 = vrot.lane.b32.xlu0 %v528, 32
  %v531 = vpop.permute.xlu0 %530
  %v533 = vmul.f32 %v515, %v531
  %535 = vrot.lane.b32.xlu0 %v382, 64
  %v536 = vpop.permute.xlu0 %535
  %539 = vrot.lane.b32.xlu0 %v459, 96
  %v540 = vpop.permute.xlu0 %539
  %v542 = vsel %vm53, %v536, %v540
  %v543 = vpack.c.bf16 %v542, %v542
  %v545 = vsel %vm241, %v543, 0
  %547 = vmatprep.subr.bf16.mxu0 0
  %548 = vmatpush1.bf16.msra.mxu0 %v233
  %549 = vmatprep.subr.bf16.mxu0 0
  %550 = vmatpush1.bf16.msra.mxu0 %v234
  %551 = vmatprep.subr.bf16.mxu0 0
  %552 = vmatpush1.bf16.msra.mxu0 %v235
  %553 = vmatprep.subr.bf16.mxu0 0
  %554 = vmatpush1.bf16.msra.mxu0 %v236
  %555 = vmatprep.subr.bf16.mxu0 0
  %556 = vmatpush1.bf16.msra.mxu0 0
  %557 = vmatprep.subr.bf16.mxu0 0
  %558 = vmatpush1.bf16.msra.mxu0 0
  %559 = vmatprep.subr.bf16.mxu0 0
  %560 = vmatpush1.bf16.msra.mxu0 0
  %561 = vmatprep.subr.bf16.mxu0 0
  %562 = vmatpush1.bf16.msra.mxu0 0
  %563 = vmatprep.subr.bf16.mxu0 0
  %564 = vmatpush1.bf16.msra.mxu0 0
  %565 = vmatprep.subr.bf16.mxu0 0
  %566 = vmatpush1.bf16.msra.mxu0 0
  %567 = vmatprep.subr.bf16.mxu0 0
  %568 = vmatpush1.bf16.msra.mxu0 0
  %569 = vmatprep.subr.bf16.mxu0 0
  %570 = vmatpush1.bf16.msra.mxu0 0
  %571 = vmatprep.subr.bf16.mxu0 0
  %572 = vmatpush1.bf16.msra.mxu0 0
  %573 = vmatprep.subr.bf16.mxu0 0
  %574 = vmatpush1.bf16.msra.mxu0 0
  %575 = vmatprep.subr.bf16.mxu0 0
  %576 = vmatpush1.bf16.msra.mxu0 0
  %577 = vmatprep.subr.bf16.mxu0 0
  %578 = vmatpush1.bf16.msra.mxu0 0
  %579 = vmatprep.mubr.bf16.mxu0 0
  %580 = vmatmul.mubr.bf16.gmra.mrb[0].mxu0 %v545
  %v581 = vpop.f32.mrb[0].mxu0
  %v582 = vadd.f32 %v215, %v581
  %v583 = vpop.f32.mrb[0].mxu0
  %v584 = vpop.f32.mrb[0].mxu0
  %v585 = vpop.f32.mrb[0].mxu0
  %586 = vdwg.mxu0
  %v587 = vxor.u32 %v582, 2147483648
  %v588 = vmul.f32 %v587, 1.442695
  %v589 = vpow.pop %v588
  %v590 = vadd.f32 %v589, 1.0
  %v591 = vrcp.pop %v590
  %v592 = vmul.f32 1.0, %v591
  %v593 = vtanh.pop %v582
  %v594 = vmul.f32 %v592, %v453
  %596 = vrot.lane.b32.xlu0 %v593, 32
  %v597 = vpop.permute.xlu0 %596
  %v599 = vmul.f32 %v592, %v597
  %601 = vrot.lane.b32.xlu0 %v599, 32
  %v602 = vpop.permute.xlu0 %601
  %v604 = vadd.f32 %v594, %v602
  %v605 = vtanh.pop %v604
  %607 = vrot.lane.b32.xlu0 %v605, 32
  %v608 = vpop.permute.xlu0 %607
  %v610 = vmul.f32 %v592, %v608
  %s611 = scalar_lea.vmem %s0, 32
  %v612 = vld [vmem:[%s611] sm:$0xff]
  %v613 = vpack.c.bf16 %v533, %v533
  %615 = vrot.lane.b32.xlu0 %v613, 64
  %v616 = vpop.permute.xlu0 %615
  %v618 = vsel %vm53, %v616, 0
  %620 = vmatprep.subr.bf16.mxu0 0
  %621 = vmatpush1.bf16.msra.mxu0 %v49
  %622 = vmatprep.subr.bf16.mxu0 0
  %623 = vmatpush1.bf16.msra.mxu0 %v50
  %624 = vmatprep.subr.bf16.mxu0 0
  %625 = vmatpush1.bf16.msra.mxu0 0
  %626 = vmatprep.subr.bf16.mxu0 0
  %627 = vmatpush1.bf16.msra.mxu0 0
  %628 = vmatprep.subr.bf16.mxu0 0
  %629 = vmatpush1.bf16.msra.mxu0 0
  %630 = vmatprep.subr.bf16.mxu0 0
  %631 = vmatpush1.bf16.msra.mxu0 0
  %632 = vmatprep.subr.bf16.mxu0 0
  %633 = vmatpush1.bf16.msra.mxu0 0
  %634 = vmatprep.subr.bf16.mxu0 0
  %635 = vmatpush1.bf16.msra.mxu0 0
  %636 = vmatprep.subr.bf16.mxu0 0
  %637 = vmatpush1.bf16.msra.mxu0 0
  %638 = vmatprep.subr.bf16.mxu0 0
  %639 = vmatpush1.bf16.msra.mxu0 0
  %640 = vmatprep.subr.bf16.mxu0 0
  %641 = vmatpush1.bf16.msra.mxu0 0
  %642 = vmatprep.subr.bf16.mxu0 0
  %643 = vmatpush1.bf16.msra.mxu0 0
  %644 = vmatprep.subr.bf16.mxu0 0
  %645 = vmatpush1.bf16.msra.mxu0 0
  %646 = vmatprep.subr.bf16.mxu0 0
  %647 = vmatpush1.bf16.msra.mxu0 0
  %648 = vmatprep.subr.bf16.mxu0 0
  %649 = vmatpush1.bf16.msra.mxu0 0
  %650 = vmatprep.subr.bf16.mxu0 0
  %651 = vmatpush1.bf16.msra.mxu0 0
  %652 = vmatprep.mubr.bf16.mxu0 0
  %653 = vmatmul.mubr.bf16.gmra.mrb[0].mxu0 %v618
  %v654 = vpop.f32.mrb[0].mxu0
  %v655 = vadd.f32 0.0, %v654
  %v656 = vpop.f32.mrb[0].mxu0
  %v657 = vpop.f32.mrb[0].mxu0
  %v658 = vpop.f32.mrb[0].mxu0
  %659 = vdwg.mxu0
  %v660 = vadd.f32 %v612, %v655
  %v661 = vxor.u32 %v660, 2147483648
  %v662 = vmul.f32 %v661, 1.442695
  %v663 = vpow.pop %v662
  %v664 = vadd.f32 %v663, 1.0
  %v665 = vrcp.pop %v664
  %v666 = vmul.f32 1.0, %v665
  %v667 = vtanh.pop %v660
  %v668 = vmul.f32 %v666, %v527
  %670 = vrot.lane.b32.xlu0 %v667, 32
  %v671 = vpop.permute.xlu0 %670
  %v673 = vmul.f32 %v666, %v671
  %675 = vrot.lane.b32.xlu0 %v673, 32
  %v676 = vpop.permute.xlu0 %675
  %v678 = vadd.f32 %v668, %v676
  %v679 = vtanh.pop %v678
  %681 = vrot.lane.b32.xlu0 %v679, 32
  %v682 = vpop.permute.xlu0 %681
  %v684 = vmul.f32 %v666, %v682
  %686 = vrot.lane.b32.xlu0 %v533, 64
  %v687 = vpop.permute.xlu0 %686
  %690 = vrot.lane.b32.xlu0 %v610, 96
  %v691 = vpop.permute.xlu0 %690
  %v693 = vsel %vm53, %v687, %v691
  %v694 = vpack.c.bf16 %v693, %v693
  %v696 = vsel %vm241, %v694, 0
  %698 = vmatprep.subr.bf16.mxu0 0
  %699 = vmatpush1.bf16.msra.mxu0 %v233
  %700 = vmatprep.subr.bf16.mxu0 0
  %701 = vmatpush1.bf16.msra.mxu0 %v234
  %702 = vmatprep.subr.bf16.mxu0 0
  %703 = vmatpush1.bf16.msra.mxu0 %v235
  %704 = vmatprep.subr.bf16.mxu0 0
  %705 = vmatpush1.bf16.msra.mxu0 %v236
  %706 = vmatprep.subr.bf16.mxu0 0
  %707 = vmatpush1.bf16.msra.mxu0 0
  %708 = vmatprep.subr.bf16.mxu0 0
  %709 = vmatpush1.bf16.msra.mxu0 0
  %710 = vmatprep.subr.bf16.mxu0 0
  %711 = vmatpush1.bf16.msra.mxu0 0
  %712 = vmatprep.subr.bf16.mxu0 0
  %713 = vmatpush1.bf16.msra.mxu0 0
  %714 = vmatprep.subr.bf16.mxu0 0
  %715 = vmatpush1.bf16.msra.mxu0 0
  %716 = vmatprep.subr.bf16.mxu0 0
  %717 = vmatpush1.bf16.msra.mxu0 0
  %718 = vmatprep.subr.bf16.mxu0 0
  %719 = vmatpush1.bf16.msra.mxu0 0
  %720 = vmatprep.subr.bf16.mxu0 0
  %721 = vmatpush1.bf16.msra.mxu0 0
  %722 = vmatprep.subr.bf16.mxu0 0
  %723 = vmatpush1.bf16.msra.mxu0 0
  %724 = vmatprep.subr.bf16.mxu0 0
  %725 = vmatpush1.bf16.msra.mxu0 0
  %726 = vmatprep.subr.bf16.mxu0 0
  %727 = vmatpush1.bf16.msra.mxu0 0
  %728 = vmatprep.subr.bf16.mxu0 0
  %729 = vmatpush1.bf16.msra.mxu0 0
  %730 = vmatprep.mubr.bf16.mxu0 0
  %731 = vmatmul.mubr.bf16.gmra.mrb[0].mxu0 %v696
  %v732 = vpop.f32.mrb[0].mxu0
  %v733 = vadd.f32 %v215, %v732
  %v734 = vpop.f32.mrb[0].mxu0
  %v735 = vpop.f32.mrb[0].mxu0
  %v736 = vpop.f32.mrb[0].mxu0
  %737 = vdwg.mxu0
  %v738 = vxor.u32 %v733, 2147483648
  %v739 = vmul.f32 %v738, 1.442695
  %v740 = vpow.pop %v739
  %v741 = vadd.f32 %v740, 1.0
  %v742 = vrcp.pop %v741
  %v743 = vmul.f32 1.0, %v742
  %v744 = vtanh.pop %v733
  %v745 = vmul.f32 %v743, %v604
  %747 = vrot.lane.b32.xlu0 %v744, 32
  %v748 = vpop.permute.xlu0 %747
  %v750 = vmul.f32 %v743, %v748
  %752 = vrot.lane.b32.xlu0 %v750, 32
  %v753 = vpop.permute.xlu0 %752
  %v755 = vadd.f32 %v745, %v753
  %v756 = vtanh.pop %v755
  %758 = vrot.lane.b32.xlu0 %v756, 32
  %v759 = vpop.permute.xlu0 %758
  %v761 = vmul.f32 %v743, %v759
  %s762 = scalar_lea.vmem %s0, 40
  %v763 = vld [vmem:[%s762] sm:$0xff]
  %v764 = vpack.c.bf16 %v684, %v684
  %766 = vrot.lane.b32.xlu0 %v764, 64
  %v767 = vpop.permute.xlu0 %766
  %v769 = vsel %vm53, %v767, 0
  %771 = vmatprep.subr.bf16.mxu0 0
  %772 = vmatpush1.bf16.msra.mxu0 %v49
  %773 = vmatprep.subr.bf16.mxu0 0
  %774 = vmatpush1.bf16.msra.mxu0 %v50
  %775 = vmatprep.subr.bf16.mxu0 0
  %776 = vmatpush1.bf16.msra.mxu0 0
  %777 = vmatprep.subr.bf16.mxu0 0
  %778 = vmatpush1.bf16.msra.mxu0 0
  %779 = vmatprep.subr.bf16.mxu0 0
  %780 = vmatpush1.bf16.msra.mxu0 0
  %781 = vmatprep.subr.bf16.mxu0 0
  %782 = vmatpush1.bf16.msra.mxu0 0
  %783 = vmatprep.subr.bf16.mxu0 0
  %784 = vmatpush1.bf16.msra.mxu0 0
  %785 = vmatprep.subr.bf16.mxu0 0
  %786 = vmatpush1.bf16.msra.mxu0 0
  %787 = vmatprep.subr.bf16.mxu0 0
  %788 = vmatpush1.bf16.msra.mxu0 0
  %789 = vmatprep.subr.bf16.mxu0 0
  %790 = vmatpush1.bf16.msra.mxu0 0
  %791 = vmatprep.subr.bf16.mxu0 0
  %792 = vmatpush1.bf16.msra.mxu0 0
  %793 = vmatprep.subr.bf16.mxu0 0
  %794 = vmatpush1.bf16.msra.mxu0 0
  %795 = vmatprep.subr.bf16.mxu0 0
  %796 = vmatpush1.bf16.msra.mxu0 0
  %797 = vmatprep.subr.bf16.mxu0 0
  %798 = vmatpush1.bf16.msra.mxu0 0
  %799 = vmatprep.subr.bf16.mxu0 0
  %800 = vmatpush1.bf16.msra.mxu0 0
  %801 = vmatprep.subr.bf16.mxu0 0
  %802 = vmatpush1.bf16.msra.mxu0 0
  %803 = vmatprep.mubr.bf16.mxu0 0
  %804 = vmatmul.mubr.bf16.gmra.mrb[0].mxu0 %v769
  %v805 = vpop.f32.mrb[0].mxu0
  %v806 = vadd.f32 0.0, %v805
  %v807 = vpop.f32.mrb[0].mxu0
  %v808 = vpop.f32.mrb[0].mxu0
  %v809 = vpop.f32.mrb[0].mxu0
  %810 = vdwg.mxu0
  %v811 = vadd.f32 %v763, %v806
  %v812 = vxor.u32 %v811, 2147483648
  %v813 = vmul.f32 %v812, 1.442695
  %v814 = vpow.pop %v813
  %v815 = vadd.f32 %v814, 1.0
  %v816 = vrcp.pop %v815
  %v817 = vmul.f32 1.0, %v816
  %v818 = vtanh.pop %v811
  %v819 = vmul.f32 %v817, %v678
  %821 = vrot.lane.b32.xlu0 %v818, 32
  %v822 = vpop.permute.xlu0 %821
  %v824 = vmul.f32 %v817, %v822
  %826 = vrot.lane.b32.xlu0 %v824, 32
  %v827 = vpop.permute.xlu0 %826
  %v829 = vadd.f32 %v819, %v827
  %v830 = vtanh.pop %v829
  %832 = vrot.lane.b32.xlu0 %v830, 32
  %v833 = vpop.permute.xlu0 %832
  %v835 = vmul.f32 %v817, %v833
  %837 = vrot.lane.b32.xlu0 %v684, 64
  %v838 = vpop.permute.xlu0 %837
  %841 = vrot.lane.b32.xlu0 %v761, 96
  %v842 = vpop.permute.xlu0 %841
  %v844 = vsel %vm53, %v838, %v842
  %v845 = vpack.c.bf16 %v844, %v844
  %v847 = vsel %vm241, %v845, 0
  %849 = vmatprep.subr.bf16.mxu0 0
  %850 = vmatpush1.bf16.msra.mxu0 %v233
  %851 = vmatprep.subr.bf16.mxu0 0
  %852 = vmatpush1.bf16.msra.mxu0 %v234
  %853 = vmatprep.subr.bf16.mxu0 0
  %854 = vmatpush1.bf16.msra.mxu0 %v235
  %855 = vmatprep.subr.bf16.mxu0 0
  %856 = vmatpush1.bf16.msra.mxu0 %v236
  %857 = vmatprep.subr.bf16.mxu0 0
  %858 = vmatpush1.bf16.msra.mxu0 0
  %859 = vmatprep.subr.bf16.mxu0 0
  %860 = vmatpush1.bf16.msra.mxu0 0
  %861 = vmatprep.subr.bf16.mxu0 0
  %862 = vmatpush1.bf16.msra.mxu0 0
  %863 = vmatprep.subr.bf16.mxu0 0
  %864 = vmatpush1.bf16.msra.mxu0 0
  %865 = vmatprep.subr.bf16.mxu0 0
  %866 = vmatpush1.bf16.msra.mxu0 0
  %867 = vmatprep.subr.bf16.mxu0 0
  %868 = vmatpush1.bf16.msra.mxu0 0
  %869 = vmatprep.subr.bf16.mxu0 0
  %870 = vmatpush1.bf16.msra.mxu0 0
  %871 = vmatprep.subr.bf16.mxu0 0
  %872 = vmatpush1.bf16.msra.mxu0 0
  %873 = vmatprep.subr.bf16.mxu0 0
  %874 = vmatpush1.bf16.msra.mxu0 0
  %875 = vmatprep.subr.bf16.mxu0 0
  %876 = vmatpush1.bf16.msra.mxu0 0
  %877 = vmatprep.subr.bf16.mxu0 0
  %878 = vmatpush1.bf16.msra.mxu0 0
  %879 = vmatprep.subr.bf16.mxu0 0
  %880 = vmatpush1.bf16.msra.mxu0 0
  %881 = vmatprep.mubr.bf16.mxu0 0
  %882 = vmatmul.mubr.bf16.gmra.mrb[0].mxu0 %v847
  %v883 = vpop.f32.mrb[0].mxu0
  %v884 = vadd.f32 %v215, %v883
  %v885 = vpop.f32.mrb[0].mxu0
  %v886 = vpop.f32.mrb[0].mxu0
  %v887 = vpop.f32.mrb[0].mxu0
  %888 = vdwg.mxu0
  %v889 = vxor.u32 %v884, 2147483648
  %v890 = vmul.f32 %v889, 1.442695
  %v891 = vpow.pop %v890
  %v892 = vadd.f32 %v891, 1.0
  %v893 = vrcp.pop %v892
  %v894 = vmul.f32 1.0, %v893
  %v895 = vtanh.pop %v884
  %v896 = vmul.f32 %v894, %v755
  %898 = vrot.lane.b32.xlu0 %v895, 32
  %v899 = vpop.permute.xlu0 %898
  %v901 = vmul.f32 %v894, %v899
  %903 = vrot.lane.b32.xlu0 %v901, 32
  %v904 = vpop.permute.xlu0 %903
  %v906 = vadd.f32 %v896, %v904
  %v907 = vtanh.pop %v906
  %909 = vrot.lane.b32.xlu0 %v907, 32
  %v910 = vpop.permute.xlu0 %909
  %v912 = vmul.f32 %v894, %v910
  %s913 = scalar_lea.vmem %s0, 48
  %v914 = vld [vmem:[%s913] sm:$0xff]
  %v915 = vpack.c.bf16 %v835, %v835
  %917 = vrot.lane.b32.xlu0 %v915, 64
  %v918 = vpop.permute.xlu0 %917
  %v920 = vsel %vm53, %v918, 0
  %922 = vmatprep.subr.bf16.mxu0 0
  %923 = vmatpush1.bf16.msra.mxu0 %v49
  %924 = vmatprep.subr.bf16.mxu0 0
  %925 = vmatpush1.bf16.msra.mxu0 %v50
  %926 = vmatprep.subr.bf16.mxu0 0
  %927 = vmatpush1.bf16.msra.mxu0 0
  %928 = vmatprep.subr.bf16.mxu0 0
  %929 = vmatpush1.bf16.msra.mxu0 0
  %930 = vmatprep.subr.bf16.mxu0 0
  %931 = vmatpush1.bf16.msra.mxu0 0
  %932 = vmatprep.subr.bf16.mxu0 0
  %933 = vmatpush1.bf16.msra.mxu0 0
  %934 = vmatprep.subr.bf16.mxu0 0
  %935 = vmatpush1.bf16.msra.mxu0 0
  %936 = vmatprep.subr.bf16.mxu0 0
  %937 = vmatpush1.bf16.msra.mxu0 0
  %938 = vmatprep.subr.bf16.mxu0 0
  %939 = vmatpush1.bf16.msra.mxu0 0
  %940 = vmatprep.subr.bf16.mxu0 0
  %941 = vmatpush1.bf16.msra.mxu0 0
  %942 = vmatprep.subr.bf16.mxu0 0
  %943 = vmatpush1.bf16.msra.mxu0 0
  %944 = vmatprep.subr.bf16.mxu0 0
  %945 = vmatpush1.bf16.msra.mxu0 0
  %946 = vmatprep.subr.bf16.mxu0 0
  %947 = vmatpush1.bf16.msra.mxu0 0
  %948 = vmatprep.subr.bf16.mxu0 0
  %949 = vmatpush1.bf16.msra.mxu0 0
  %950 = vmatprep.subr.bf16.mxu0 0
  %951 = vmatpush1.bf16.msra.mxu0 0
  %952 = vmatprep.subr.bf16.mxu0 0
  %953 = vmatpush1.bf16.msra.mxu0 0
  %954 = vmatprep.mubr.bf16.mxu0 0
  %955 = vmatmul.mubr.bf16.gmra.mrb[0].mxu0 %v920
  %v956 = vpop.f32.mrb[0].mxu0
  %v957 = vadd.f32 0.0, %v956
  %v958 = vpop.f32.mrb[0].mxu0
  %v959 = vpop.f32.mrb[0].mxu0
  %v960 = vpop.f32.mrb[0].mxu0
  %961 = vdwg.mxu0
  %v962 = vadd.f32 %v914, %v957
  %v963 = vxor.u32 %v962, 2147483648
  %v964 = vmul.f32 %v963, 1.442695
  %v965 = vpow.pop %v964
  %v966 = vadd.f32 %v965, 1.0
  %v967 = vrcp.pop %v966
  %v968 = vmul.f32 1.0, %v967
  %v969 = vtanh.pop %v962
  %v970 = vmul.f32 %v968, %v829
  %972 = vrot.lane.b32.xlu0 %v969, 32
  %v973 = vpop.permute.xlu0 %972
  %v975 = vmul.f32 %v968, %v973
  %977 = vrot.lane.b32.xlu0 %v975, 32
  %v978 = vpop.permute.xlu0 %977
  %v980 = vadd.f32 %v970, %v978
  %v981 = vtanh.pop %v980
  %983 = vrot.lane.b32.xlu0 %v981, 32
  %v984 = vpop.permute.xlu0 %983
  %v986 = vmul.f32 %v968, %v984
  %988 = vrot.lane.b32.xlu0 %v835, 64
  %v989 = vpop.permute.xlu0 %988
  %992 = vrot.lane.b32.xlu0 %v912, 96
  %v993 = vpop.permute.xlu0 %992
  %v995 = vsel %vm53, %v989, %v993
  %v996 = vpack.c.bf16 %v995, %v995
  %v998 = vsel %vm241, %v996, 0
  %1000 = vmatprep.subr.bf16.mxu0 0
  %1001 = vmatpush1.bf16.msra.mxu0 %v233
  %1002 = vmatprep.subr.bf16.mxu0 0
  %1003 = vmatpush1.bf16.msra.mxu0 %v234
  %1004 = vmatprep.subr.bf16.mxu0 0
  %1005 = vmatpush1.bf16.msra.mxu0 %v235
  %1006 = vmatprep.subr.bf16.mxu0 0
  %1007 = vmatpush1.bf16.msra.mxu0 %v236
  %1008 = vmatprep.subr.bf16.mxu0 0
  %1009 = vmatpush1.bf16.msra.mxu0 0
  %1010 = vmatprep.subr.bf16.mxu0 0
  %1011 = vmatpush1.bf16.msra.mxu0 0
  %1012 = vmatprep.subr.bf16.mxu0 0
  %1013 = vmatpush1.bf16.msra.mxu0 0
  %1014 = vmatprep.subr.bf16.mxu0 0
  %1015 = vmatpush1.bf16.msra.mxu0 0
  %1016 = vmatprep.subr.bf16.mxu0 0
  %1017 = vmatpush1.bf16.msra.mxu0 0
  %1018 = vmatprep.subr.bf16.mxu0 0
  %1019 = vmatpush1.bf16.msra.mxu0 0
  %1020 = vmatprep.subr.bf16.mxu0 0
  %1021 = vmatpush1.bf16.msra.mxu0 0
  %1022 = vmatprep.subr.bf16.mxu0 0
  %1023 = vmatpush1.bf16.msra.mxu0 0
  %1024 = vmatprep.subr.bf16.mxu0 0
  %1025 = vmatpush1.bf16.msra.mxu0 0
  %1026 = vmatprep.subr.bf16.mxu0 0
  %1027 = vmatpush1.bf16.msra.mxu0 0
  %1028 = vmatprep.subr.bf16.mxu0 0
  %1029 = vmatpush1.bf16.msra.mxu0 0
  %1030 = vmatprep.subr.bf16.mxu0 0
  %1031 = vmatpush1.bf16.msra.mxu0 0
  %1032 = vmatprep.mubr.bf16.mxu0 0
  %1033 = vmatmul.mubr.bf16.gmra.mrb[0].mxu0 %v998
  %v1034 = vpop.f32.mrb[0].mxu0
  %v1035 = vadd.f32 %v215, %v1034
  %v1036 = vpop.f32.mrb[0].mxu0
  %v1037 = vpop.f32.mrb[0].mxu0
  %v1038 = vpop.f32.mrb[0].mxu0
  %1039 = vdwg.mxu0
  %v1040 = vxor.u32 %v1035, 2147483648
  %v1041 = vmul.f32 %v1040, 1.442695
  %v1042 = vpow.pop %v1041
  %v1043 = vadd.f32 %v1042, 1.0
  %v1044 = vrcp.pop %v1043
  %v1045 = vmul.f32 1.0, %v1044
  %v1046 = vtanh.pop %v1035
  %v1047 = vmul.f32 %v1045, %v906
  %1049 = vrot.lane.b32.xlu0 %v1046, 32
  %v1050 = vpop.permute.xlu0 %1049
  %v1052 = vmul.f32 %v1045, %v1050
  %1054 = vrot.lane.b32.xlu0 %v1052, 32
  %v1055 = vpop.permute.xlu0 %1054
  %v1057 = vadd.f32 %v1047, %v1055
  %v1058 = vtanh.pop %v1057
  %1060 = vrot.lane.b32.xlu0 %v1058, 32
  %v1061 = vpop.permute.xlu0 %1060
  %v1063 = vmul.f32 %v1045, %v1061
  %s1064 = scalar_lea.vmem %s0, 56
  %v1065 = vld [vmem:[%s1064] sm:$0xff]
  %v1066 = vpack.c.bf16 %v986, %v986
  %1068 = vrot.lane.b32.xlu0 %v1066, 64
  %v1069 = vpop.permute.xlu0 %1068
  %v1071 = vsel %vm53, %v1069, 0
  %1073 = vmatprep.subr.bf16.mxu0 0
  %1074 = vmatpush1.bf16.msra.mxu0 %v49
  %1075 = vmatprep.subr.bf16.mxu0 0
  %1076 = vmatpush1.bf16.msra.mxu0 %v50
  %1077 = vmatprep.subr.bf16.mxu0 0
  %1078 = vmatpush1.bf16.msra.mxu0 0
  %1079 = vmatprep.subr.bf16.mxu0 0
  %1080 = vmatpush1.bf16.msra.mxu0 0
  %1081 = vmatprep.subr.bf16.mxu0 0
  %1082 = vmatpush1.bf16.msra.mxu0 0
  %1083 = vmatprep.subr.bf16.mxu0 0
  %1084 = vmatpush1.bf16.msra.mxu0 0
  %1085 = vmatprep.subr.bf16.mxu0 0
  %1086 = vmatpush1.bf16.msra.mxu0 0
  %1087 = vmatprep.subr.bf16.mxu0 0
  %1088 = vmatpush1.bf16.msra.mxu0 0
  %1089 = vmatprep.subr.bf16.mxu0 0
  %1090 = vmatpush1.bf16.msra.mxu0 0
  %1091 = vmatprep.subr.bf16.mxu0 0
  %1092 = vmatpush1.bf16.msra.mxu0 0
  %1093 = vmatprep.subr.bf16.mxu0 0
  %1094 = vmatpush1.bf16.msra.mxu0 0
  %1095 = vmatprep.subr.bf16.mxu0 0
  %1096 = vmatpush1.bf16.msra.mxu0 0
  %1097 = vmatprep.subr.bf16.mxu0 0
  %1098 = vmatpush1.bf16.msra.mxu0 0
  %1099 = vmatprep.subr.bf16.mxu0 0
  %1100 = vmatpush1.bf16.msra.mxu0 0
  %1101 = vmatprep.subr.bf16.mxu0 0
  %1102 = vmatpush1.bf16.msra.mxu0 0
  %1103 = vmatprep.subr.bf16.mxu0 0
  %1104 = vmatpush1.bf16.msra.mxu0 0
  %1105 = vmatprep.mubr.bf16.mxu0 0
  %1106 = vmatmul.mubr.bf16.gmra.mrb[0].mxu0 %v1071
  %v1107 = vpop.f32.mrb[0].mxu0
  %v1108 = vadd.f32 0.0, %v1107
  %v1109 = vpop.f32.mrb[0].mxu0
  %v1110 = vpop.f32.mrb[0].mxu0
  %v1111 = vpop.f32.mrb[0].mxu0
  %1112 = vdwg.mxu0
  %v1113 = vadd.f32 %v1065, %v1108
  %v1114 = vxor.u32 %v1113, 2147483648
  %v1115 = vmul.f32 %v1114, 1.442695
  %v1116 = vpow.pop %v1115
  %v1117 = vadd.f32 %v1116, 1.0
  %v1118 = vrcp.pop %v1117
  %v1119 = vmul.f32 1.0, %v1118
  %v1120 = vtanh.pop %v1113
  %v1121 = vmul.f32 %v1119, %v980
  %1123 = vrot.lane.b32.xlu0 %v1120, 32
  %v1124 = vpop.permute.xlu0 %1123
  %v1126 = vmul.f32 %v1119, %v1124
  %1128 = vrot.lane.b32.xlu0 %v1126, 32
  %v1129 = vpop.permute.xlu0 %1128
  %v1131 = vadd.f32 %v1121, %v1129
  %v1132 = vtanh.pop %v1131
  %1134 = vrot.lane.b32.xlu0 %v1132, 32
  %v1135 = vpop.permute.xlu0 %1134
  %v1137 = vmul.f32 %v1119, %v1135
  %1139 = vrot.lane.b32.xlu0 %v986, 64
  %v1140 = vpop.permute.xlu0 %1139
  %1143 = vrot.lane.b32.xlu0 %v1063, 96
  %v1144 = vpop.permute.xlu0 %1143
  %v1146 = vsel %vm53, %v1140, %v1144
  %v1147 = vpack.c.bf16 %v1146, %v1146
  %v1149 = vsel %vm241, %v1147, 0
  %1151 = vmatprep.subr.bf16.mxu0 0
  %1152 = vmatpush1.bf16.msra.mxu0 %v233
  %1153 = vmatprep.subr.bf16.mxu0 0
  %1154 = vmatpush1.bf16.msra.mxu0 %v234
  %1155 = vmatprep.subr.bf16.mxu0 0
  %1156 = vmatpush1.bf16.msra.mxu0 %v235
  %1157 = vmatprep.subr.bf16.mxu0 0
  %1158 = vmatpush1.bf16.msra.mxu0 %v236
  %1159 = vmatprep.subr.bf16.mxu0 0
  %1160 = vmatpush1.bf16.msra.mxu0 0
  %1161 = vmatprep.subr.bf16.mxu0 0
  %1162 = vmatpush1.bf16.msra.mxu0 0
  %1163 = vmatprep.subr.bf16.mxu0 0
  %1164 = vmatpush1.bf16.msra.mxu0 0
  %1165 = vmatprep.subr.bf16.mxu0 0
  %1166 = vmatpush1.bf16.msra.mxu0 0
  %1167 = vmatprep.subr.bf16.mxu0 0
  %1168 = vmatpush1.bf16.msra.mxu0 0
  %1169 = vmatprep.subr.bf16.mxu0 0
  %1170 = vmatpush1.bf16.msra.mxu0 0
  %1171 = vmatprep.subr.bf16.mxu0 0
  %1172 = vmatpush1.bf16.msra.mxu0 0
  %1173 = vmatprep.subr.bf16.mxu0 0
  %1174 = vmatpush1.bf16.msra.mxu0 0
  %1175 = vmatprep.subr.bf16.mxu0 0
  %1176 = vmatpush1.bf16.msra.mxu0 0
  %1177 = vmatprep.subr.bf16.mxu0 0
  %1178 = vmatpush1.bf16.msra.mxu0 0
  %1179 = vmatprep.subr.bf16.mxu0 0
  %1180 = vmatpush1.bf16.msra.mxu0 0
  %1181 = vmatprep.subr.bf16.mxu0 0
  %1182 = vmatpush1.bf16.msra.mxu0 0
  %1183 = vmatprep.mubr.bf16.mxu0 0
  %1184 = vmatmul.mubr.bf16.gmra.mrb[0].mxu0 %v1149
  %v1185 = vpop.f32.mrb[0].mxu0
  %v1186 = vadd.f32 %v215, %v1185
  %v1187 = vpop.f32.mrb[0].mxu0
  %v1188 = vpop.f32.mrb[0].mxu0
  %v1189 = vpop.f32.mrb[0].mxu0
  %1190 = vdwg.mxu0
  %v1191 = vxor.u32 %v1186, 2147483648
  %v1192 = vmul.f32 %v1191, 1.442695
  %v1193 = vpow.pop %v1192
  %v1194 = vadd.f32 %v1193, 1.0
  %v1195 = vrcp.pop %v1194
  %v1196 = vmul.f32 1.0, %v1195
  %v1197 = vtanh.pop %v1186
  %v1198 = vmul.f32 %v1196, %v1057
  %1200 = vrot.lane.b32.xlu0 %v1197, 32
  %v1201 = vpop.permute.xlu0 %1200
  %v1203 = vmul.f32 %v1196, %v1201
  %1205 = vrot.lane.b32.xlu0 %v1203, 32
  %v1206 = vpop.permute.xlu0 %1205
  %v1208 = vadd.f32 %v1198, %v1206
  %v1209 = vtanh.pop %v1208
  %1211 = vrot.lane.b32.xlu0 %v1209, 32
  %v1212 = vpop.permute.xlu0 %1211
  %v1214 = vmul.f32 %v1196, %v1212
  %1216 = vrot.lane.b32.xlu0 %v1137, 64
  %v1217 = vpop.permute.xlu0 %1216
  %1220 = vrot.lane.b32.xlu0 %v1214, 96
  %v1221 = vpop.permute.xlu0 %1220
  %v1223 = vsel %vm53, %v1217, %v1221
  %v1224 = vpack.c.bf16 %v1223, %v1223
  %v1226 = vsel %vm241, %v1224, 0
  %1228 = vmatprep.subr.bf16.mxu0 0
  %1229 = vmatpush1.bf16.msra.mxu0 %v233
  %1230 = vmatprep.subr.bf16.mxu0 0
  %1231 = vmatpush1.bf16.msra.mxu0 %v234
  %1232 = vmatprep.subr.bf16.mxu0 0
  %1233 = vmatpush1.bf16.msra.mxu0 %v235
  %1234 = vmatprep.subr.bf16.mxu0 0
  %1235 = vmatpush1.bf16.msra.mxu0 %v236
  %1236 = vmatprep.subr.bf16.mxu0 0
  %1237 = vmatpush1.bf16.msra.mxu0 0
  %1238 = vmatprep.subr.bf16.mxu0 0
  %1239 = vmatpush1.bf16.msra.mxu0 0
  %1240 = vmatprep.subr.bf16.mxu0 0
  %1241 = vmatpush1.bf16.msra.mxu0 0
  %1242 = vmatprep.subr.bf16.mxu0 0
  %1243 = vmatpush1.bf16.msra.mxu0 0
  %1244 = vmatprep.subr.bf16.mxu0 0
  %1245 = vmatpush1.bf16.msra.mxu0 0
  %1246 = vmatprep.subr.bf16.mxu0 0
  %1247 = vmatpush1.bf16.msra.mxu0 0
  %1248 = vmatprep.subr.bf16.mxu0 0
  %1249 = vmatpush1.bf16.msra.mxu0 0
  %1250 = vmatprep.subr.bf16.mxu0 0
  %1251 = vmatpush1.bf16.msra.mxu0 0
  %1252 = vmatprep.subr.bf16.mxu0 0
  %1253 = vmatpush1.bf16.msra.mxu0 0
  %1254 = vmatprep.subr.bf16.mxu0 0
  %1255 = vmatpush1.bf16.msra.mxu0 0
  %1256 = vmatprep.subr.bf16.mxu0 0
  %1257 = vmatpush1.bf16.msra.mxu0 0
  %1258 = vmatprep.subr.bf16.mxu0 0
  %1259 = vmatpush1.bf16.msra.mxu0 0
  %1260 = vmatprep.mubr.bf16.mxu0 0
  %1261 = vmatmul.mubr.bf16.gmra.mrb[0].mxu0 %v1226
  %v1262 = vpop.f32.mrb[0].mxu0
  %v1263 = vadd.f32 %v215, %v1262
  %v1264 = vpop.f32.mrb[0].mxu0
  %v1265 = vpop.f32.mrb[0].mxu0
  %v1266 = vpop.f32.mrb[0].mxu0
  %1267 = vdwg.mxu0
  %v1268 = vxor.u32 %v1263, 2147483648
  %v1269 = vmul.f32 %v1268, 1.442695
  %v1270 = vpow.pop %v1269
  %v1271 = vadd.f32 %v1270, 1.0
  %v1272 = vrcp.pop %v1271
  %v1273 = vmul.f32 1.0, %v1272
  %v1274 = vtanh.pop %v1263
  %v1275 = vmul.f32 %v1273, %v1208
  %1277 = vrot.lane.b32.xlu0 %v1274, 32
  %v1278 = vpop.permute.xlu0 %1277
  %v1280 = vmul.f32 %v1273, %v1278
  %1282 = vrot.lane.b32.xlu0 %v1280, 32
  %v1283 = vpop.permute.xlu0 %1282
  %v1285 = vadd.f32 %v1275, %v1283
  %v1286 = vtanh.pop %v1285
  %1288 = vrot.lane.b32.xlu0 %v1286, 32
  %v1289 = vpop.permute.xlu0 %1288
  %v1291 = vmul.f32 %v1273, %v1289
  %v1292 = vpack.c.bf16 %v1291, %v1291
  %v1293 = vld [vmem:[%s4] sm:$0xf]
  %v1294 = vld [vmem:[%s4 + $0x4] sm:$0xf]
  %v1295 = vld [vmem:[%s4 + $0x8] sm:$0xf]
  %v1296 = vld [vmem:[%s4 + $0xc] sm:$0xf]
  %v1297 = vld [vmem:[%s5] sm:$0x1]
  %v1299 = vlaneseq
  %v1300 = vshrl.u32 %v1299, 7
  %v1301 = vsub.s32 0, %v1300
  %v1302 = vrot.slane %v1297, %v1301
  %1305 = vrot.lane.b32.xlu0 %v1292, 64
  %v1306 = vpop.permute.xlu0 %1305
  %v1311 = vunpack.c.l.b16 %v1293
  %v1312 = vunpack.c.l.b16 %v1294
  %v1313 = vunpack.c.l.b16 %v1295
  %v1314 = vunpack.c.l.b16 %v1296
  %v1315 = vpack.c.b16 %v1312, %v1311
  %v1316 = vpack.c.b16 %v1314, %v1313
  %v1320 = vsel %vm53, %v1306, 0
  %1322 = vmatprep.subr.bf16.mxu0 0
  %1323 = vmatpush1.bf16.msra.mxu0 %v1315
  %1324 = vmatprep.subr.bf16.mxu0 0
  %1325 = vmatpush1.bf16.msra.mxu0 %v1316
  %1326 = vmatprep.subr.bf16.mxu0 0
  %1327 = vmatpush1.bf16.msra.mxu0 0
  %1328 = vmatprep.subr.bf16.mxu0 0
  %1329 = vmatpush1.bf16.msra.mxu0 0
  %1330 = vmatprep.subr.bf16.mxu0 0
  %1331 = vmatpush1.bf16.msra.mxu0 0
  %1332 = vmatprep.subr.bf16.mxu0 0
  %1333 = vmatpush1.bf16.msra.mxu0 0
  %1334 = vmatprep.subr.bf16.mxu0 0
  %1335 = vmatpush1.bf16.msra.mxu0 0
  %1336 = vmatprep.subr.bf16.mxu0 0
  %1337 = vmatpush1.bf16.msra.mxu0 0
  %1338 = vmatprep.subr.bf16.mxu0 0
  %1339 = vmatpush1.bf16.msra.mxu0 0
  %1340 = vmatprep.subr.bf16.mxu0 0
  %1341 = vmatpush1.bf16.msra.mxu0 0
  %1342 = vmatprep.subr.bf16.mxu0 0
  %1343 = vmatpush1.bf16.msra.mxu0 0
  %1344 = vmatprep.subr.bf16.mxu0 0
  %1345 = vmatpush1.bf16.msra.mxu0 0
  %1346 = vmatprep.subr.bf16.mxu0 0
  %1347 = vmatpush1.bf16.msra.mxu0 0
  %1348 = vmatprep.subr.bf16.mxu0 0
  %1349 = vmatpush1.bf16.msra.mxu0 0
  %1350 = vmatprep.subr.bf16.mxu0 0
  %1351 = vmatpush1.bf16.msra.mxu0 0
  %1352 = vmatprep.subr.bf16.mxu0 0
  %1353 = vmatpush1.bf16.msra.mxu0 0
  %1354 = vmatprep.mubr.bf16.mxu0 0
  %1355 = vmatmul.mubr.bf16.gmra.mrb[0].mxu0 %v1320
  %v1356 = vpop.f32.mrb[0].mxu0
  %v1357 = vadd.f32 %v1302, %v1356
  %v1358 = vpop.f32.mrb[0].mxu0
  %v1359 = vpop.f32.mrb[0].mxu0
  %v1360 = vpop.f32.mrb[0].mxu0
  %1361 = vdwg.mxu0
  %v1362 = vmax.f32 %v1357, 0.0
  %v1363 = vpack.c.bf16 %v1362, %v1362
  %v1364 = vld [vmem:[%s6] sm:$0xf]
  %v1365 = vld [vmem:[%s6 + $0x4] sm:$0xf]
  %v1366 = vld [vmem:[%s6 + $0x8] sm:$0xf]
  %v1367 = vld [vmem:[%s6 + $0xc] sm:$0xf]
  %v1368 = vld [vmem:[%s6 + $0x10] sm:$0xf]
  %v1369 = vld [vmem:[%s6 + $0x14] sm:$0xf]
  %v1370 = vld [vmem:[%s6 + $0x18] sm:$0xf]
  %v1371 = vld [vmem:[%s6 + $0x1c] sm:$0xf]
  %v1372 = vld [vmem:[%s7] sm:$0x1]
  %v1374 = vlaneseq
  %v1375 = vshrl.u32 %v1374, 7
  %v1376 = vsub.s32 0, %v1375
  %v1377 = vrot.slane %v1372, %v1376
  %v1387 = vunpack.c.l.b16 %v1364
  %v1388 = vunpack.c.l.b16 %v1365
  %v1389 = vunpack.c.l.b16 %v1366
  %v1390 = vunpack.c.l.b16 %v1367
  %v1391 = vunpack.c.l.b16 %v1368
  %v1392 = vunpack.c.l.b16 %v1369
  %v1393 = vunpack.c.l.b16 %v1370
  %v1394 = vunpack.c.l.b16 %v1371
  %v1395 = vpack.c.b16 %v1388, %v1387
  %v1396 = vpack.c.b16 %v1390, %v1389
  %v1397 = vpack.c.b16 %v1392, %v1391
  %v1398 = vpack.c.b16 %v1394, %v1393
  %v1404 = vsel %vm241, %v1363, 0
  %1406 = vmatprep.subr.bf16.mxu0 0
  %1407 = vmatpush1.bf16.msra.mxu0 %v1395
  %1408 = vmatprep.subr.bf16.mxu0 0
  %1409 = vmatpush1.bf16.msra.mxu0 %v1396
  %1410 = vmatprep.subr.bf16.mxu0 0
  %1411 = vmatpush1.bf16.msra.mxu0 %v1397
  %1412 = vmatprep.subr.bf16.mxu0 0
  %1413 = vmatpush1.bf16.msra.mxu0 %v1398
  %1414 = vmatprep.subr.bf16.mxu0 0
  %1415 = vmatpush1.bf16.msra.mxu0 0
  %1416 = vmatprep.subr.bf16.mxu0 0
  %1417 = vmatpush1.bf16.msra.mxu0 0
  %1418 = vmatprep.subr.bf16.mxu0 0
  %1419 = vmatpush1.bf16.msra.mxu0 0
  %1420 = vmatprep.subr.bf16.mxu0 0
  %1421 = vmatpush1.bf16.msra.mxu0 0
  %1422 = vmatprep.subr.bf16.mxu0 0
  %1423 = vmatpush1.bf16.msra.mxu0 0
  %1424 = vmatprep.subr.bf16.mxu0 0
  %1425 = vmatpush1.bf16.msra.mxu0 0
  %1426 = vmatprep.subr.bf16.mxu0 0
  %1427 = vmatpush1.bf16.msra.mxu0 0
  %1428 = vmatprep.subr.bf16.mxu0 0
  %1429 = vmatpush1.bf16.msra.mxu0 0
  %1430 = vmatprep.subr.bf16.mxu0 0
  %1431 = vmatpush1.bf16.msra.mxu0 0
  %1432 = vmatprep.subr.bf16.mxu0 0
  %1433 = vmatpush1.bf16.msra.mxu0 0
  %1434 = vmatprep.subr.bf16.mxu0 0
  %1435 = vmatpush1.bf16.msra.mxu0 0
  %1436 = vmatprep.subr.bf16.mxu0 0
  %1437 = vmatpush1.bf16.msra.mxu0 0
  %1438 = vmatprep.mubr.bf16.mxu0 0
  %1439 = vmatmul.mubr.bf16.gmra.mrb[0].mxu0 %v1404
  %v1440 = vpop.f32.mrb[0].mxu0
  %v1441 = vadd.f32 %v1377, %v1440
  %v1442 = vpop.f32.mrb[0].mxu0
  %v1443 = vpop.f32.mrb[0].mxu0
  %v1444 = vpop.f32.mrb[0].mxu0
  %1445 = vdwg.mxu0
  %v1446 = vmax.f32 %v1441, 0.0
  %1448 = vrot.lane.b32.xlu0 %v1362, 96
  %v1449 = vpop.permute.xlu0 %1448
  %v1451 = vsel %vm53, %v1446, %v1449
  %v1452 = vpack.c.bf16 %v1451, %v1451
  %v1453 = vld [vmem:[%s8] sm:$0xf]
  %v1454 = vld [vmem:[%s8 + $0x4] sm:$0xf]
  %v1455 = vld [vmem:[%s8 + $0x8] sm:$0xf]
  %v1456 = vld [vmem:[%s8 + $0xc] sm:$0xf]
  %v1457 = vld [vmem:[%s8 + $0x10] sm:$0xf]
  %v1458 = vld [vmem:[%s8 + $0x14] sm:$0xf]
  %v1459 = vld [vmem:[%s8 + $0x18] sm:$0xf]
  %v1460 = vld [vmem:[%s8 + $0x1c] sm:$0xf]
  %v1461 = vld [vmem:[%s9] sm:$0x1]
  %v1463 = vlaneseq
  %v1464 = vshrl.u32 %v1463, 7
  %v1465 = vsub.s32 0, %v1464
  %v1466 = vrot.slane %v1461, %v1465
  %v1476 = vunpack.c.l.b16 %v1453
  %v1477 = vunpack.c.l.b16 %v1454
  %v1478 = vunpack.c.l.b16 %v1455
  %v1479 = vunpack.c.l.b16 %v1456
  %v1480 = vunpack.c.l.b16 %v1457
  %v1481 = vunpack.c.l.b16 %v1458
  %v1482 = vunpack.c.l.b16 %v1459
  %v1483 = vunpack.c.l.b16 %v1460
  %v1484 = vpack.c.b16 %v1477, %v1476
  %v1485 = vpack.c.b16 %v1479, %v1478
  %v1486 = vpack.c.b16 %v1481, %v1480
  %v1487 = vpack.c.b16 %v1483, %v1482
  %v1493 = vsel %vm241, %v1452, 0
  %1495 = vmatprep.subr.bf16.mxu0 0
  %1496 = vmatpush1.bf16.msra.mxu0 %v1484
  %1497 = vmatprep.subr.bf16.mxu0 0
  %1498 = vmatpush1.bf16.msra.mxu0 %v1485
  %1499 = vmatprep.subr.bf16.mxu0 0
  %1500 = vmatpush1.bf16.msra.mxu0 %v1486
  %1501 = vmatprep.subr.bf16.mxu0 0
  %1502 = vmatpush1.bf16.msra.mxu0 %v1487
  %1503 = vmatprep.subr.bf16.mxu0 0
  %1504 = vmatpush1.bf16.msra.mxu0 0
  %1505 = vmatprep.subr.bf16.mxu0 0
  %1506 = vmatpush1.bf16.msra.mxu0 0
  %1507 = vmatprep.subr.bf16.mxu0 0
  %1508 = vmatpush1.bf16.msra.mxu0 0
  %1509 = vmatprep.subr.bf16.mxu0 0
  %1510 = vmatpush1.bf16.msra.mxu0 0
  %1511 = vmatprep.subr.bf16.mxu0 0
  %1512 = vmatpush1.bf16.msra.mxu0 0
  %1513 = vmatprep.subr.bf16.mxu0 0
  %1514 = vmatpush1.bf16.msra.mxu0 0
  %1515 = vmatprep.subr.bf16.mxu0 0
  %1516 = vmatpush1.bf16.msra.mxu0 0
  %1517 = vmatprep.subr.bf16.mxu0 0
  %1518 = vmatpush1.bf16.msra.mxu0 0
  %1519 = vmatprep.subr.bf16.mxu0 0
  %1520 = vmatpush1.bf16.msra.mxu0 0
  %1521 = vmatprep.subr.bf16.mxu0 0
  %1522 = vmatpush1.bf16.msra.mxu0 0
  %1523 = vmatprep.subr.bf16.mxu0 0
  %1524 = vmatpush1.bf16.msra.mxu0 0
  %1525 = vmatprep.subr.bf16.mxu0 0
  %1526 = vmatpush1.bf16.msra.mxu0 0
  %1527 = vmatprep.mubr.bf16.mxu0 0
  %1528 = vmatmul.mubr.bf16.gmra.mrb[0].mxu0 %v1493
  %v1529 = vpop.f32.mrb[0].mxu0
  %v1530 = vadd.f32 %v1466, %v1529
  %v1531 = vpop.f32.mrb[0].mxu0
  %v1532 = vpop.f32.mrb[0].mxu0
  %v1533 = vpop.f32.mrb[0].mxu0
  %1534 = vdwg.mxu0
  %v1535 = vlaneseq
  %v1536 = vand.u32 %v1535, 127
  %vm1537 = vcmp.eq.s32.totalorder %v1536, 8
  %v1538 = vxor.u32 %v1530, 2147483648
  %v1539 = vmul.f32 %v1538, 1.442695
  %v1540 = vpow.pop %v1539
  %v1541 = vadd.f32 %v1540, 1.0
  %v1542 = vrcp.pop %v1541
  %v1543 = vmul.f32 1.0, %v1542
  %v1544 = vsel %vm1537, %v1543, %v1530
  %1545 = vst [vmem:[%s10] sm:$0xff] %v1544
  // Predicated region
  $region42: #{forward.1} parent=0 // pred_check
    _
  $region43: #{forward.1} parent=0 // pred_check_branch
    %1547 = sbr.rel (0) target = $region45
  $region44: #{forward.1} parent=0 // pred_region
    _
  $region45: #{forward.1} parent=0 // pred_fallthru
    _
  // Predicated region
  $region46: #{forward.1} parent=0 // pred_check
    _
  $region47: #{forward.1} parent=0 // pred_check_branch
    %1549 = sbr.rel (0) target = $region49
  $region48: #{forward.1} parent=0 // pred_region
    _
  $region49: #{forward.1} parent=0 // pred_fallthru
    _

</llo_original>
